<compile_context>
chip_gen: v7x
topology: tpu7x:2x2x1
jax: 0.10.0
libtpu: 0.0.40
codegen_flags: <defaults>
</compile_context>

<pallas_src>
import math
import functools

import jax
import jax.numpy as jnp
from jax import lax
from jax.experimental import pallas as pl
from jax.experimental.pallas import tpu as pltpu


def _attn_kernel(x_ref, wqkv_ref, bqkv_ref, wo_ref, bo_ref, o_ref, *,
                 n_head, dq, dv, hq):
    # x_ref: (Bblk, T, C) bf16; wqkv_ref: (C, 2*hq+hv) bf16; bqkv_ref: (1, 2*hq+hv) f32
    # wo_ref: (hv, C) bf16; bo_ref: (1, C) f32; o_ref: (Bblk, T, C)
    bblk, seq, cdim = x_ref.shape
    rows = bblk * seq

    # ---- fused Q/K/V projection: one MXU matmul over all tokens in the block
    x2 = x_ref[...].reshape(rows, cdim)                              # bf16
    qkv = jnp.dot(x2, wqkv_ref[...], preferred_element_type=jnp.float32)
    qkv = qkv + bqkv_ref[...]                                        # f32, (rows, 2*hq+hv)

    # causal mask, built once and shared by every (batch, head)
    row_id = lax.broadcasted_iota(jnp.int32, (1, seq, seq), 1)
    col_id = lax.broadcasted_iota(jnp.int32, (1, seq, seq), 2)
    causal = row_id >= col_id
    neg = jnp.float32(-1e30)          # finite: safe even if scores hit bf16 later

    out_acc = jnp.zeros((rows, cdim), jnp.float32)

    # static head loop (n_head is small); batch elements handled by batched einsum
    for h in range(n_head):
        qh = qkv[:, h * dq:(h + 1) * dq]                    # scale already folded in
        kh = qkv[:, hq + h * dq:hq + (h + 1) * dq]
        vh = qkv[:, 2 * hq + h * dv:2 * hq + (h + 1) * dv]

        qh = qh.reshape(bblk, seq, dq).astype(jnp.bfloat16)
        kh = kh.reshape(bblk, seq, dq).astype(jnp.bfloat16)
        vh = vh.reshape(bblk, seq, dv).astype(jnp.bfloat16)

        att = jnp.einsum('bqd,bkd->bqk', qh, kh,
                         preferred_element_type=jnp.float32)         # (Bblk, T, T)
        att = jnp.where(causal, att, neg)

        m = jnp.max(att, axis=-1, keepdims=True)
        e = jnp.exp(att - m)
        s = jnp.sum(e, axis=-1, keepdims=True)
        p = (e * pl.reciprocal(s, approx=True)).astype(jnp.bfloat16)  # EUP recip

        yh = jnp.einsum('bqk,bkd->bqd', p, vh,
                        preferred_element_type=jnp.float32)          # (Bblk, T, dv)
        yh = yh.reshape(rows, dv).astype(jnp.bfloat16)

        # accumulate this head's slice of the output projection (no concat)
        out_acc = out_acc + jnp.dot(yh, wo_ref[h * dv:(h + 1) * dv, :],
                                    preferred_element_type=jnp.float32)

    out = out_acc + bo_ref[...]
    o_ref[...] = out.reshape(bblk, seq, cdim).astype(o_ref.dtype)


def causal_self_attention(x, params, *, n_head, qk_head_embd, vo_head_embd,
                          batch_block=None):
    B, T, C = x.shape
    hq = n_head * qk_head_embd
    hv = n_head * vo_head_embd
    wq, bq, wk, bk, wv, bv, wo, bo = params

    scale = 1.0 / math.sqrt(qk_head_embd)

    # Fold attention scale into the Q projection, pre-transpose to (in, out),
    # and fuse Q/K/V weights+biases (all free at trace time).
    wqkv_t = jnp.concatenate([wq.T * scale, wk.T, wv.T], axis=1)   # (C, 2*hq+hv)
    bqkv = jnp.concatenate([bq * scale, bk, bv]).reshape(1, 2 * hq + hv)
    wo_t = wo.T                                                    # (hv, C)
    bo2 = bo.reshape(1, C)

    # bf16 MXU inputs; biases stay f32 (added on the f32 accumulator).
    x_bf = x.astype(jnp.bfloat16)
    wqkv_t = wqkv_t.astype(jnp.bfloat16)
    wo_t = wo_t.astype(jnp.bfloat16)
    bqkv = bqkv.astype(jnp.float32)
    bo2 = bo2.astype(jnp.float32)

    if batch_block is None:
        # Amortize per-grid-step overhead while keeping >=2 grid steps when
        # possible (so both v7x TensorCores get work via "parallel").
        batch_block = max(1, B // 2)
    assert B % batch_block == 0, (B, batch_block)
    nb = B // batch_block

    F = 2 * hq + hv
    kernel = functools.partial(_attn_kernel, n_head=n_head,
                               dq=qk_head_embd, dv=vo_head_embd, hq=hq)

    return pl.pallas_call(
        kernel,
        out_shape=jax.ShapeDtypeStruct((B, T, C), x.dtype),
        grid=(nb,),
        in_specs=[
            pl.BlockSpec((batch_block, T, C), lambda b: (b, 0, 0)),   # x
            pl.BlockSpec((C, F), lambda b: (0, 0)),                    # fused Wqkv^T
            pl.BlockSpec((1, F), lambda b: (0, 0)),                    # fused bias
            pl.BlockSpec((hv, C), lambda b: (0, 0)),                   # Wo^T
            pl.BlockSpec((1, C), lambda b: (0, 0)),                    # bo
        ],
        out_specs=pl.BlockSpec((batch_block, T, C), lambda b: (b, 0, 0)),
        compiler_params=pltpu.CompilerParams(
            dimension_semantics=("parallel",)),
    )(x_bf, wqkv_t, bqkv, wo_t, bo2)


def reference(x, params, *, n_head, qk_head_embd, vo_head_embd):
    # plain-JAX f32 reference mirroring the PyTorch forward (eval mode)
    B, T, C = x.shape
    wq, bq, wk, bk, wv, bv, wo, bo = params
    q = x @ wq.T + bq
    k = x @ wk.T + bk
    v = x @ wv.T + bv
    q = q.reshape(B, T, n_head, qk_head_embd).transpose(0, 2, 1, 3)
    k = k.reshape(B, T, n_head, qk_head_embd).transpose(0, 2, 1, 3)
    v = v.reshape(B, T, n_head, vo_head_embd).transpose(0, 2, 1, 3)
    att = (q @ k.transpose(0, 1, 3, 2)) * (1.0 / math.sqrt(qk_head_embd))
    mask = jnp.tril(jnp.ones((T, T), dtype=bool))
    att = jnp.where(mask[None, None], att, -jnp.inf)
    att = jax.nn.softmax(att, axis=-1)
    y = att @ v
    y = y.transpose(0, 2, 1, 3).reshape(B, T, n_head * vo_head_embd)
    return y @ wo.T + bo


if __name__ == "__main__":
    # small config
    B, T = 4, 8
    n_embd, n_head = 32, 4
    qk_head_embd, vo_head_embd = 8, 8
    Hq = n_head * qk_head_embd
    Hv = n_head * vo_head_embd

    key = jax.random.PRNGKey(0)
    ks = jax.random.split(key, 9)
    scale = 0.1
    x = jax.random.normal(ks[0], (B, T, n_embd), dtype=jnp.float32)
    wq = scale * jax.random.normal(ks[1], (Hq, n_embd), dtype=jnp.float32)
    bq = scale * jax.random.normal(ks[2], (Hq,), dtype=jnp.float32)
    wk = scale * jax.random.normal(ks[3], (Hq, n_embd), dtype=jnp.float32)
    bk = scale * jax.random.normal(ks[4], (Hq,), dtype=jnp.float32)
    wv = scale * jax.random.normal(ks[5], (Hv, n_embd), dtype=jnp.float32)
    bv = scale * jax.random.normal(ks[6], (Hv,), dtype=jnp.float32)
    wo = scale * jax.random.normal(ks[7], (n_embd, Hv), dtype=jnp.float32)
    bo = scale * jax.random.normal(ks[8], (n_embd,), dtype=jnp.float32)
    params = (wq, bq, wk, bk, wv, bv, wo, bo)

    out = causal_self_attention(x, params, n_head=n_head,
                                qk_head_embd=qk_head_embd,
                                vo_head_embd=vo_head_embd)
    out = jax.block_until_ready(out)

    ref = reference(x, params, n_head=n_head,
                    qk_head_embd=qk_head_embd, vo_head_embd=vo_head_embd)
    assert out.shape == (B, T, n_embd)
    # bf16 MXU inputs + approx reciprocal -> compare against f32 ref with a
    # bf16-appropriate tolerance.
    err = float(jnp.max(jnp.abs(out.astype(jnp.float32) - ref)))
    assert jnp.allclose(out.astype(jnp.float32), ref, atol=2e-2, rtol=2e-2), err
    print("KERNEL_OK")
</pallas_src>

<mosaic_0001>
module attributes {stable_mosaic.version = 11 : i64} {
  func.func @_attn_kernel(%arg0: i32, %arg1: memref<2x8x32xbf16, #tpu.memory_space<vmem>>, %arg2: memref<32x96xbf16, #tpu.memory_space<vmem>>, %arg3: memref<1x96xf32, #tpu.memory_space<vmem>>, %arg4: memref<32x32xbf16, #tpu.memory_space<vmem>>, %arg5: memref<1x32xf32, #tpu.memory_space<vmem>>, %arg6: memref<2x8x32xf32, #tpu.memory_space<vmem>>) attributes {dimension_semantics = [#tpu.dimension_semantics<parallel>], iteration_bounds = array<i64: 2>, scalar_prefetch = 0 : i64, scratch_operands = 0 : i64, tpu.core_type = #tpu.core_type<tc>, window_params = [{transform_indices = @transform_0, window_bounds = array<i64: 2, 8, 32>}, {pipeline_mode = #tpu.pipeline_mode<synchronous>, transform_indices = @transform_1, window_bounds = array<i64: 32, 96>}, {pipeline_mode = #tpu.pipeline_mode<synchronous>, transform_indices = @transform_2, window_bounds = array<i64: 1, 96>}, {pipeline_mode = #tpu.pipeline_mode<synchronous>, transform_indices = @transform_3, window_bounds = array<i64: 32, 32>}, {pipeline_mode = #tpu.pipeline_mode<synchronous>, transform_indices = @transform_4, window_bounds = array<i64: 1, 32>}, {transform_indices = @transform_5, window_bounds = array<i64: 2, 8, 32>}]} {
    %c0 = arith.constant 0 : index
    %c0_0 = arith.constant 0 : index
    %c0_1 = arith.constant 0 : index
    %0 = vector.load %arg1[%c0, %c0_0, %c0_1] : memref<2x8x32xbf16, #tpu.memory_space<vmem>>, vector<2x8x32xbf16>
    %1 = vector.shape_cast %0 : vector<2x8x32xbf16> to vector<16x32xbf16>
    %c0_2 = arith.constant 0 : index
    %c0_3 = arith.constant 0 : index
    %2 = vector.load %arg2[%c0_2, %c0_3] : memref<32x96xbf16, #tpu.memory_space<vmem>>, vector<32x96xbf16>
    %cst = arith.constant dense<0.000000e+00> : vector<16x96xf32>
    %3 = tpu.matmul %1, %2, %cst {dimension_numbers = #tpu.dot_dimension_numbers<[1], [0], [0], [1], [0, 0, 1, 1], [], []>} : vector<16x32xbf16>, vector<32x96xbf16>, vector<16x96xf32> -> vector<16x96xf32>
    %c0_4 = arith.constant 0 : index
    %c0_5 = arith.constant 0 : index
    %4 = vector.load %arg3[%c0_4, %c0_5] : memref<1x96xf32, #tpu.memory_space<vmem>>, vector<1x96xf32>
    %5 = vector.broadcast %4 : vector<1x96xf32> to vector<16x96xf32>
    %6 = arith.addf %3, %5 : vector<16x96xf32>
    %7 = tpu.iota {dimensions = array<i32: 1>} : vector<1x8x8xi32>
    %8 = tpu.iota {dimensions = array<i32: 2>} : vector<1x8x8xi32>
    %9 = arith.cmpi sge, %7, %8 : vector<1x8x8xi32>
    %cst_6 = arith.constant 0.000000e+00 : f32
    %10 = vector.broadcast %cst_6 : f32 to vector<16x32xf32>
    %11 = vector.extract_strided_slice %6 {offsets = [0, 0], sizes = [16, 8], strides = [1, 1]} : vector<16x96xf32> to vector<16x8xf32>
    %12 = vector.extract_strided_slice %6 {offsets = [0, 32], sizes = [16, 8], strides = [1, 1]} : vector<16x96xf32> to vector<16x8xf32>
    %13 = vector.extract_strided_slice %6 {offsets = [0, 64], sizes = [16, 8], strides = [1, 1]} : vector<16x96xf32> to vector<16x8xf32>
    %14 = vector.shape_cast %11 : vector<16x8xf32> to vector<2x8x8xf32>
    %15 = arith.truncf %14 : vector<2x8x8xf32> to vector<2x8x8xbf16>
    %16 = vector.shape_cast %12 : vector<16x8xf32> to vector<2x8x8xf32>
    %17 = arith.truncf %16 : vector<2x8x8xf32> to vector<2x8x8xbf16>
    %18 = vector.shape_cast %13 : vector<16x8xf32> to vector<2x8x8xf32>
    %19 = arith.truncf %18 : vector<2x8x8xf32> to vector<2x8x8xbf16>
    "tpu.trace_start"() <{level = 10 : i32, message = "bqd,bkd->bqk"}> : () -> ()
    %cst_7 = arith.constant dense<0.000000e+00> : vector<2x8x8xf32>
    %20 = tpu.matmul %15, %17, %cst_7 {dimension_numbers = #tpu.dot_dimension_numbers<[2], [2], [1], [1], [0, 0, 0, 1, 1, 1], [0], [0]>} : vector<2x8x8xbf16>, vector<2x8x8xbf16>, vector<2x8x8xf32> -> vector<2x8x8xf32>
    %cst_8 = arith.constant -1.000000e+30 : f32
    "tpu.trace_stop"() : () -> ()
    %21 = vector.shape_cast %9 : vector<1x8x8xi1> to vector<1x8x8xi1>
    %22 = vector.broadcast %21 : vector<1x8x8xi1> to vector<2x8x8xi1>
    %23 = vector.broadcast %cst_8 : f32 to vector<2x8x8xf32>
    %24 = arith.select %22, %20, %23 : vector<2x8x8xi1>, vector<2x8x8xf32>
    %cst_9 = arith.constant dense<0xFF800000> : vector<2x8xf32>
    %25 = vector.multi_reduction <maximumf>, %24, %cst_9 [2] : vector<2x8x8xf32> to vector<2x8xf32>
    %26 = vector.shape_cast %25 : vector<2x8xf32> to vector<2x8x1xf32>
    %27 = vector.broadcast %26 : vector<2x8x1xf32> to vector<2x8x8xf32>
    %28 = arith.subf %24, %27 : vector<2x8x8xf32>
    %29 = math.exp %28 : vector<2x8x8xf32>
    %cst_10 = arith.constant dense<0.000000e+00> : vector<2x8xf32>
    %30 = vector.multi_reduction <add>, %29, %cst_10 [2] : vector<2x8x8xf32> to vector<2x8xf32>
    %31 = vector.shape_cast %30 : vector<2x8xf32> to vector<2x8x1xf32>
    %32 = tpu.reciprocal %31 {approx = true} : vector<2x8x1xf32> -> vector<2x8x1xf32>
    %33 = vector.broadcast %32 : vector<2x8x1xf32> to vector<2x8x8xf32>
    %34 = arith.mulf %29, %33 : vector<2x8x8xf32>
    %35 = arith.truncf %34 : vector<2x8x8xf32> to vector<2x8x8xbf16>
    "tpu.trace_start"() <{level = 10 : i32, message = "bqk,bkd->bqd"}> : () -> ()
    %cst_11 = arith.constant dense<0.000000e+00> : vector<2x8x8xf32>
    %36 = tpu.matmul %35, %19, %cst_11 {dimension_numbers = #tpu.dot_dimension_numbers<[2], [1], [1], [2], [0, 0, 0, 1, 1, 2], [0], [0]>} : vector<2x8x8xbf16>, vector<2x8x8xbf16>, vector<2x8x8xf32> -> vector<2x8x8xf32>
    "tpu.trace_stop"() : () -> ()
    %37 = vector.shape_cast %36 : vector<2x8x8xf32> to vector<16x8xf32>
    %38 = arith.truncf %37 : vector<16x8xf32> to vector<16x8xbf16>
    %c0_12 = arith.constant 0 : index
    %c0_13 = arith.constant 0 : index
    %39 = vector.load %arg4[%c0_12, %c0_13] : memref<32x32xbf16, #tpu.memory_space<vmem>>, vector<8x32xbf16>
    %cst_14 = arith.constant dense<0.000000e+00> : vector<16x32xf32>
    %40 = tpu.matmul %38, %39, %cst_14 {dimension_numbers = #tpu.dot_dimension_numbers<[1], [0], [0], [1], [0, 0, 1, 1], [], []>} : vector<16x8xbf16>, vector<8x32xbf16>, vector<16x32xf32> -> vector<16x32xf32>
    %41 = arith.addf %10, %40 : vector<16x32xf32>
    %42 = vector.extract_strided_slice %6 {offsets = [0, 8], sizes = [16, 8], strides = [1, 1]} : vector<16x96xf32> to vector<16x8xf32>
    %43 = vector.extract_strided_slice %6 {offsets = [0, 40], sizes = [16, 8], strides = [1, 1]} : vector<16x96xf32> to vector<16x8xf32>
    %44 = vector.extract_strided_slice %6 {offsets = [0, 72], sizes = [16, 8], strides = [1, 1]} : vector<16x96xf32> to vector<16x8xf32>
    %45 = vector.shape_cast %42 : vector<16x8xf32> to vector<2x8x8xf32>
    %46 = arith.truncf %45 : vector<2x8x8xf32> to vector<2x8x8xbf16>
    %47 = vector.shape_cast %43 : vector<16x8xf32> to vector<2x8x8xf32>
    %48 = arith.truncf %47 : vector<2x8x8xf32> to vector<2x8x8xbf16>
    %49 = vector.shape_cast %44 : vector<16x8xf32> to vector<2x8x8xf32>
    %50 = arith.truncf %49 : vector<2x8x8xf32> to vector<2x8x8xbf16>
    "tpu.trace_start"() <{level = 10 : i32, message = "bqd,bkd->bqk"}> : () -> ()
    %cst_15 = arith.constant dense<0.000000e+00> : vector<2x8x8xf32>
    %51 = tpu.matmul %46, %48, %cst_15 {dimension_numbers = #tpu.dot_dimension_numbers<[2], [2], [1], [1], [0, 0, 0, 1, 1, 1], [0], [0]>} : vector<2x8x8xbf16>, vector<2x8x8xbf16>, vector<2x8x8xf32> -> vector<2x8x8xf32>
    %cst_16 = arith.constant -1.000000e+30 : f32
    "tpu.trace_stop"() : () -> ()
    %52 = vector.shape_cast %9 : vector<1x8x8xi1> to vector<1x8x8xi1>
    %53 = vector.broadcast %52 : vector<1x8x8xi1> to vector<2x8x8xi1>
    %54 = vector.broadcast %cst_16 : f32 to vector<2x8x8xf32>
    %55 = arith.select %53, %51, %54 : vector<2x8x8xi1>, vector<2x8x8xf32>
    %cst_17 = arith.constant dense<0xFF800000> : vector<2x8xf32>
    %56 = vector.multi_reduction <maximumf>, %55, %cst_17 [2] : vector<2x8x8xf32> to vector<2x8xf32>
    %57 = vector.shape_cast %56 : vector<2x8xf32> to vector<2x8x1xf32>
    %58 = vector.broadcast %57 : vector<2x8x1xf32> to vector<2x8x8xf32>
    %59 = arith.subf %55, %58 : vector<2x8x8xf32>
    %60 = math.exp %59 : vector<2x8x8xf32>
    %cst_18 = arith.constant dense<0.000000e+00> : vector<2x8xf32>
    %61 = vector.multi_reduction <add>, %60, %cst_18 [2] : vector<2x8x8xf32> to vector<2x8xf32>
    %62 = vector.shape_cast %61 : vector<2x8xf32> to vector<2x8x1xf32>
    %63 = tpu.reciprocal %62 {approx = true} : vector<2x8x1xf32> -> vector<2x8x1xf32>
    %64 = vector.broadcast %63 : vector<2x8x1xf32> to vector<2x8x8xf32>
    %65 = arith.mulf %60, %64 : vector<2x8x8xf32>
    %66 = arith.truncf %65 : vector<2x8x8xf32> to vector<2x8x8xbf16>
    "tpu.trace_start"() <{level = 10 : i32, message = "bqk,bkd->bqd"}> : () -> ()
    %cst_19 = arith.constant dense<0.000000e+00> : vector<2x8x8xf32>
    %67 = tpu.matmul %66, %50, %cst_19 {dimension_numbers = #tpu.dot_dimension_numbers<[2], [1], [1], [2], [0, 0, 0, 1, 1, 2], [0], [0]>} : vector<2x8x8xbf16>, vector<2x8x8xbf16>, vector<2x8x8xf32> -> vector<2x8x8xf32>
    "tpu.trace_stop"() : () -> ()
    %68 = vector.shape_cast %67 : vector<2x8x8xf32> to vector<16x8xf32>
    %69 = arith.truncf %68 : vector<16x8xf32> to vector<16x8xbf16>
    %c8 = arith.constant 8 : index
    %c0_20 = arith.constant 0 : index
    %70 = vector.load %arg4[%c8, %c0_20] : memref<32x32xbf16, #tpu.memory_space<vmem>>, vector<8x32xbf16>
    %cst_21 = arith.constant dense<0.000000e+00> : vector<16x32xf32>
    %71 = tpu.matmul %69, %70, %cst_21 {dimension_numbers = #tpu.dot_dimension_numbers<[1], [0], [0], [1], [0, 0, 1, 1], [], []>} : vector<16x8xbf16>, vector<8x32xbf16>, vector<16x32xf32> -> vector<16x32xf32>
    %72 = arith.addf %41, %71 : vector<16x32xf32>
    %73 = vector.extract_strided_slice %6 {offsets = [0, 16], sizes = [16, 8], strides = [1, 1]} : vector<16x96xf32> to vector<16x8xf32>
    %74 = vector.extract_strided_slice %6 {offsets = [0, 48], sizes = [16, 8], strides = [1, 1]} : vector<16x96xf32> to vector<16x8xf32>
    %75 = vector.extract_strided_slice %6 {offsets = [0, 80], sizes = [16, 8], strides = [1, 1]} : vector<16x96xf32> to vector<16x8xf32>
    %76 = vector.shape_cast %73 : vector<16x8xf32> to vector<2x8x8xf32>
    %77 = arith.truncf %76 : vector<2x8x8xf32> to vector<2x8x8xbf16>
    %78 = vector.shape_cast %74 : vector<16x8xf32> to vector<2x8x8xf32>
    %79 = arith.truncf %78 : vector<2x8x8xf32> to vector<2x8x8xbf16>
    %80 = vector.shape_cast %75 : vector<16x8xf32> to vector<2x8x8xf32>
    %81 = arith.truncf %80 : vector<2x8x8xf32> to vector<2x8x8xbf16>
    "tpu.trace_start"() <{level = 10 : i32, message = "bqd,bkd->bqk"}> : () -> ()
    %cst_22 = arith.constant dense<0.000000e+00> : vector<2x8x8xf32>
    %82 = tpu.matmul %77, %79, %cst_22 {dimension_numbers = #tpu.dot_dimension_numbers<[2], [2], [1], [1], [0, 0, 0, 1, 1, 1], [0], [0]>} : vector<2x8x8xbf16>, vector<2x8x8xbf16>, vector<2x8x8xf32> -> vector<2x8x8xf32>
    %cst_23 = arith.constant -1.000000e+30 : f32
    "tpu.trace_stop"() : () -> ()
    %83 = vector.shape_cast %9 : vector<1x8x8xi1> to vector<1x8x8xi1>
    %84 = vector.broadcast %83 : vector<1x8x8xi1> to vector<2x8x8xi1>
    %85 = vector.broadcast %cst_23 : f32 to vector<2x8x8xf32>
    %86 = arith.select %84, %82, %85 : vector<2x8x8xi1>, vector<2x8x8xf32>
    %cst_24 = arith.constant dense<0xFF800000> : vector<2x8xf32>
    %87 = vector.multi_reduction <maximumf>, %86, %cst_24 [2] : vector<2x8x8xf32> to vector<2x8xf32>
    %88 = vector.shape_cast %87 : vector<2x8xf32> to vector<2x8x1xf32>
    %89 = vector.broadcast %88 : vector<2x8x1xf32> to vector<2x8x8xf32>
    %90 = arith.subf %86, %89 : vector<2x8x8xf32>
    %91 = math.exp %90 : vector<2x8x8xf32>
    %cst_25 = arith.constant dense<0.000000e+00> : vector<2x8xf32>
    %92 = vector.multi_reduction <add>, %91, %cst_25 [2] : vector<2x8x8xf32> to vector<2x8xf32>
    %93 = vector.shape_cast %92 : vector<2x8xf32> to vector<2x8x1xf32>
    %94 = tpu.reciprocal %93 {approx = true} : vector<2x8x1xf32> -> vector<2x8x1xf32>
    %95 = vector.broadcast %94 : vector<2x8x1xf32> to vector<2x8x8xf32>
    %96 = arith.mulf %91, %95 : vector<2x8x8xf32>
    %97 = arith.truncf %96 : vector<2x8x8xf32> to vector<2x8x8xbf16>
    "tpu.trace_start"() <{level = 10 : i32, message = "bqk,bkd->bqd"}> : () -> ()
    %cst_26 = arith.constant dense<0.000000e+00> : vector<2x8x8xf32>
    %98 = tpu.matmul %97, %81, %cst_26 {dimension_numbers = #tpu.dot_dimension_numbers<[2], [1], [1], [2], [0, 0, 0, 1, 1, 2], [0], [0]>} : vector<2x8x8xbf16>, vector<2x8x8xbf16>, vector<2x8x8xf32> -> vector<2x8x8xf32>
    "tpu.trace_stop"() : () -> ()
    %99 = vector.shape_cast %98 : vector<2x8x8xf32> to vector<16x8xf32>
    %100 = arith.truncf %99 : vector<16x8xf32> to vector<16x8xbf16>
    %c16 = arith.constant 16 : index
    %c0_27 = arith.constant 0 : index
    %101 = vector.load %arg4[%c16, %c0_27] : memref<32x32xbf16, #tpu.memory_space<vmem>>, vector<8x32xbf16>
    %cst_28 = arith.constant dense<0.000000e+00> : vector<16x32xf32>
    %102 = tpu.matmul %100, %101, %cst_28 {dimension_numbers = #tpu.dot_dimension_numbers<[1], [0], [0], [1], [0, 0, 1, 1], [], []>} : vector<16x8xbf16>, vector<8x32xbf16>, vector<16x32xf32> -> vector<16x32xf32>
    %103 = arith.addf %72, %102 : vector<16x32xf32>
    %104 = vector.extract_strided_slice %6 {offsets = [0, 24], sizes = [16, 8], strides = [1, 1]} : vector<16x96xf32> to vector<16x8xf32>
    %105 = vector.extract_strided_slice %6 {offsets = [0, 56], sizes = [16, 8], strides = [1, 1]} : vector<16x96xf32> to vector<16x8xf32>
    %106 = vector.extract_strided_slice %6 {offsets = [0, 88], sizes = [16, 8], strides = [1, 1]} : vector<16x96xf32> to vector<16x8xf32>
    %107 = vector.shape_cast %104 : vector<16x8xf32> to vector<2x8x8xf32>
    %108 = arith.truncf %107 : vector<2x8x8xf32> to vector<2x8x8xbf16>
    %109 = vector.shape_cast %105 : vector<16x8xf32> to vector<2x8x8xf32>
    %110 = arith.truncf %109 : vector<2x8x8xf32> to vector<2x8x8xbf16>
    %111 = vector.shape_cast %106 : vector<16x8xf32> to vector<2x8x8xf32>
    %112 = arith.truncf %111 : vector<2x8x8xf32> to vector<2x8x8xbf16>
    "tpu.trace_start"() <{level = 10 : i32, message = "bqd,bkd->bqk"}> : () -> ()
    %cst_29 = arith.constant dense<0.000000e+00> : vector<2x8x8xf32>
    %113 = tpu.matmul %108, %110, %cst_29 {dimension_numbers = #tpu.dot_dimension_numbers<[2], [2], [1], [1], [0, 0, 0, 1, 1, 1], [0], [0]>} : vector<2x8x8xbf16>, vector<2x8x8xbf16>, vector<2x8x8xf32> -> vector<2x8x8xf32>
    %cst_30 = arith.constant -1.000000e+30 : f32
    "tpu.trace_stop"() : () -> ()
    %114 = vector.shape_cast %9 : vector<1x8x8xi1> to vector<1x8x8xi1>
    %115 = vector.broadcast %114 : vector<1x8x8xi1> to vector<2x8x8xi1>
    %116 = vector.broadcast %cst_30 : f32 to vector<2x8x8xf32>
    %117 = arith.select %115, %113, %116 : vector<2x8x8xi1>, vector<2x8x8xf32>
    %cst_31 = arith.constant dense<0xFF800000> : vector<2x8xf32>
    %118 = vector.multi_reduction <maximumf>, %117, %cst_31 [2] : vector<2x8x8xf32> to vector<2x8xf32>
    %119 = vector.shape_cast %118 : vector<2x8xf32> to vector<2x8x1xf32>
    %120 = vector.broadcast %119 : vector<2x8x1xf32> to vector<2x8x8xf32>
    %121 = arith.subf %117, %120 : vector<2x8x8xf32>
    %122 = math.exp %121 : vector<2x8x8xf32>
    %cst_32 = arith.constant dense<0.000000e+00> : vector<2x8xf32>
    %123 = vector.multi_reduction <add>, %122, %cst_32 [2] : vector<2x8x8xf32> to vector<2x8xf32>
    %124 = vector.shape_cast %123 : vector<2x8xf32> to vector<2x8x1xf32>
    %125 = tpu.reciprocal %124 {approx = true} : vector<2x8x1xf32> -> vector<2x8x1xf32>
    %126 = vector.broadcast %125 : vector<2x8x1xf32> to vector<2x8x8xf32>
    %127 = arith.mulf %122, %126 : vector<2x8x8xf32>
    %128 = arith.truncf %127 : vector<2x8x8xf32> to vector<2x8x8xbf16>
    "tpu.trace_start"() <{level = 10 : i32, message = "bqk,bkd->bqd"}> : () -> ()
    %cst_33 = arith.constant dense<0.000000e+00> : vector<2x8x8xf32>
    %129 = tpu.matmul %128, %112, %cst_33 {dimension_numbers = #tpu.dot_dimension_numbers<[2], [1], [1], [2], [0, 0, 0, 1, 1, 2], [0], [0]>} : vector<2x8x8xbf16>, vector<2x8x8xbf16>, vector<2x8x8xf32> -> vector<2x8x8xf32>
    "tpu.trace_stop"() : () -> ()
    %130 = vector.shape_cast %129 : vector<2x8x8xf32> to vector<16x8xf32>
    %131 = arith.truncf %130 : vector<16x8xf32> to vector<16x8xbf16>
    %c24 = arith.constant 24 : index
    %c0_34 = arith.constant 0 : index
    %132 = vector.load %arg4[%c24, %c0_34] : memref<32x32xbf16, #tpu.memory_space<vmem>>, vector<8x32xbf16>
    %cst_35 = arith.constant dense<0.000000e+00> : vector<16x32xf32>
    %133 = tpu.matmul %131, %132, %cst_35 {dimension_numbers = #tpu.dot_dimension_numbers<[1], [0], [0], [1], [0, 0, 1, 1], [], []>} : vector<16x8xbf16>, vector<8x32xbf16>, vector<16x32xf32> -> vector<16x32xf32>
    %134 = arith.addf %103, %133 : vector<16x32xf32>
    %c0_36 = arith.constant 0 : index
    %c0_37 = arith.constant 0 : index
    %135 = vector.load %arg5[%c0_36, %c0_37] : memref<1x32xf32, #tpu.memory_space<vmem>>, vector<1x32xf32>
    %136 = vector.broadcast %135 : vector<1x32xf32> to vector<16x32xf32>
    %137 = arith.addf %134, %136 : vector<16x32xf32>
    %138 = vector.shape_cast %137 : vector<16x32xf32> to vector<2x8x32xf32>
    %c0_38 = arith.constant 0 : index
    %c0_39 = arith.constant 0 : index
    %c0_40 = arith.constant 0 : index
    %139 = vector.load %arg6[%c0_38, %c0_39, %c0_40] : memref<2x8x32xf32, #tpu.memory_space<vmem>>, vector<2x8x32xf32>
    tpu.vector_store %arg6[%c0_38, %c0_39, %c0_40], %138 {strides = array<i32>} : memref<2x8x32xf32, #tpu.memory_space<vmem>>, vector<2x8x32xf32>,
    return
  }
  func.func @transform_0(%arg0: i32) -> (i32, i32, i32) {
    %c0_i32 = arith.constant 0 : i32
    %c0_i32_0 = arith.constant 0 : i32
    %c0_i32_1 = arith.constant 0 : i32
    return %arg0, %c0_i32, %c0_i32_0 : i32, i32, i32
  }
  func.func @transform_1(%arg0: i32) -> (i32, i32) {
    %c0_i32 = arith.constant 0 : i32
    %c0_i32_0 = arith.constant 0 : i32
    %c0_i32_1 = arith.constant 0 : i32
    return %c0_i32, %c0_i32_0 : i32, i32
  }
  func.func @transform_2(%arg0: i32) -> (i32, i32) {
    %c0_i32 = arith.constant 0 : i32
    %c0_i32_0 = arith.constant 0 : i32
    %c0_i32_1 = arith.constant 0 : i32
    return %c0_i32, %c0_i32_0 : i32, i32
  }
  func.func @transform_3(%arg0: i32) -> (i32, i32) {
    %c0_i32 = arith.constant 0 : i32
    %c0_i32_0 = arith.constant 0 : i32
    %c0_i32_1 = arith.constant 0 : i32
    return %c0_i32, %c0_i32_0 : i32, i32
  }
  func.func @transform_4(%arg0: i32) -> (i32, i32) {
    %c0_i32 = arith.constant 0 : i32
    %c0_i32_0 = arith.constant 0 : i32
    %c0_i32_1 = arith.constant 0 : i32
    return %c0_i32, %c0_i32_0 : i32, i32
  }
  func.func @transform_5(%arg0: i32) -> (i32, i32, i32) {
    %c0_i32 = arith.constant 0 : i32
    %c0_i32_0 = arith.constant 0 : i32
    %c0_i32_1 = arith.constant 0 : i32
    return %arg0, %c0_i32, %c0_i32_0 : i32, i32, i32
  }
}

</mosaic_0001>

<llo_original>
// kernel: tpu_custom_call.1
$region0: #{tpu_custom_call.1}
  #allocation0 [shape = 'u32[]', space=smem, size = 0x4, offset = 0x4, fixed_abs, tag = 'smem constant byte address 0x4 - core index']
  #allocation1 [shape = 'u32[144,128]{1,0:T(1,128)}', space=vmem, size = 0x12000, scoped, tag = 'internal scratch']
  %s0 = inlined_call_operand.hbm [shape: bf16[4,8,32], index: 0, kind: input, shape index: {}]
  %s1 = inlined_call_operand.hbm [shape: bf16[32,96], index: 1, kind: input, shape index: {}]
  %s2 = inlined_call_operand.vmem [shape: f32[1,96], index: 2, kind: input, shape index: {}]
  %s3 = inlined_call_operand.hbm [shape: bf16[32,32], index: 3, kind: input, shape index: {}]
  %s4 = inlined_call_operand.vmem [shape: f32[1,32], index: 4, kind: input, shape index: {}]
  %s5 = inlined_call_operand.hbm [shape: f32[4,8,32], index: 5, kind: output, shape index: {}]
  %s6 = sld [smem:[#allocation0]]
  $region65: #{tpu_custom_call.1} parent=0
    _
  %s8 = ssub.s32 1, %s6
  %s9 = scalar_select 0, %s8, %s6
  $region1: #{tpu_custom_call.1} parent=0
    #allocation2 [shape = 'u8[8192]{0}', space=vmem, size = 0x2000, scoped, tag = 'input window, operand 0']
    #allocation3 [shape = 's32[2]{0}', space=sflag, size = 0x8, scoped, tag = 'scoped memory for tpu_custom_call.1']
    #allocation4 [shape = 's32[2]{0}', space=sflag, size = 0x8, scoped, tag = 'scoped memory for tpu_custom_call.1']
    #allocation5 [shape = 'u8[8192]{0}', space=vmem, size = 0x2000, scoped, tag = 'input window, operand 1, single buffered']
    #allocation6 [shape = 's32[1]{0}', space=sflag, size = 0x4, scoped, tag = 'scoped memory for tpu_custom_call.1']
    #allocation7 [shape = 'u8[8192]{0}', space=vmem, size = 0x2000, scoped, tag = 'input window, operand 3, single buffered']
    #allocation8 [shape = 'u8[16384]{0}', space=vmem, size = 0x4000, scoped, tag = 'output window, operand 0']
    %10 = vsyncpa [#allocation3], 0
    %s11 = scalar_lea.sflag [#allocation3], 1
    %12 = vsyncpa %s11, 0
    %13 = vsyncpa [#allocation6], 0
    %14 = vsyncpa [#allocation4], 0
    %s15 = scalar_lea.sflag [#allocation4], 1
    %16 = vsyncpa %s15, 0
    loop: start=0, step=1, limit=4
    $region2: #{tpu_custom_call.1} parent=1 // loop_pre_header
      _
    $region3: #{tpu_custom_call.1} parent=1 // loop_header
      %s18 = sphi 0, %s22
      %p19 = scmp.ge.s32.totalorder %s18, 4
      %s28 = sphi 0, %s30
      %s31 = sphi 0, %s28
      %s32 = sphi 0, %s31
      %s48 = sphi 0, %s32
      %s52 = sphi 0, %s52
      %s54 = sphi 0, %s52
      %s55 = sphi 0, %s54
      %s69 = sphi 0, %s55
      %s73 = sphi 0, %s73
      %s75 = sphi 0, %s73
      %s76 = sphi 0, %s75
      %s90 = sphi 0, %s76
      %s94 = sphi 0, %s94
      %s96 = sphi 0, %s94
      %s97 = sphi 0, %s96
      %s111 = sphi 0, %s97
      %s115 = sphi 0, %s115
      %s117 = sphi 0, %s115
      %s118 = sphi 0, %s117
      %s132 = sphi 0, %s118
      %s138 = sphi 0, %s140
      %s141 = sphi 0, %s138
      %s142 = sphi 0, %s141
      %s158 = sphi 0, %s142
    $region4: #{tpu_custom_call.1} parent=1 // loop_header_branch
      %21 = sbr.rel (%p19) target = $region8
    $region5: #{tpu_custom_call.1} parent=1 // loop_body
      %s23 = ssub.s32 %s18, 1
      %s24 = ssub.s32 %s18, 2
      %s25 = sadd.s32 %s18, 1
      %s26 = ssub.s32 %s18, %s25
      %p27 = scmp.eq.s32.totalorder %s26, 0
      %s29 = sadd.s32 %s28, 1
      %s30 = scalar_select %p27, %s28, %s29
      %p33 = pneg %p27
      %p34 = scmp.eq.s32.totalorder %s18, 1
      %p35 = por %p33, %p34
      %p36 = scmp.ne.s32.totalorder %s28, %s31
      %p37 = scmp.eq.s32.totalorder %s18, 0
      %p38 = por %p36, %p37
      %p39 = scmp.ne.s32.totalorder %s28, %s31
      %p40 = scmp.eq.s32.totalorder %s23, 1
      %p41 = por %p39, %p40
      %p42 = scmp.ne.s32.totalorder %s31, %s32
      %p43 = scmp.eq.s32.totalorder %s23, 0
      %p44 = por %p42, %p43
      %p45 = scmp.ne.s32.totalorder %s31, %s32
      %p46 = scmp.eq.s32.totalorder %s24, 1
      %p47 = por %p45, %p46
      %p49 = scmp.ne.s32.totalorder %s32, %s48
      %p50 = scmp.eq.s32.totalorder %s24, 0
      %p51 = por %p49, %p50
      %s53 = sadd.s32 %s52, 1
      %p56 = scmp.eq.s32.totalorder %s18, 1
      %p57 = scmp.ne.s32.totalorder %s52, %s54
      %p58 = scmp.eq.s32.totalorder %s18, 0
      %p59 = por %p57, %p58
      %p60 = scmp.ne.s32.totalorder %s52, %s54
      %p61 = scmp.eq.s32.totalorder %s23, 1
      %p62 = por %p60, %p61
      %p63 = scmp.ne.s32.totalorder %s54, %s55
      %p64 = scmp.eq.s32.totalorder %s23, 0
      %p65 = por %p63, %p64
      %p66 = scmp.ne.s32.totalorder %s54, %s55
      %p67 = scmp.eq.s32.totalorder %s24, 1
      %p68 = por %p66, %p67
      %p70 = scmp.ne.s32.totalorder %s55, %s69
      %p71 = scmp.eq.s32.totalorder %s24, 0
      %p72 = por %p70, %p71
      %s74 = sadd.s32 %s73, 1
      %p77 = scmp.eq.s32.totalorder %s18, 1
      %p78 = scmp.ne.s32.totalorder %s73, %s75
      %p79 = scmp.eq.s32.totalorder %s18, 0
      %p80 = por %p78, %p79
      %p81 = scmp.ne.s32.totalorder %s73, %s75
      %p82 = scmp.eq.s32.totalorder %s23, 1
      %p83 = por %p81, %p82
      %p84 = scmp.ne.s32.totalorder %s75, %s76
      %p85 = scmp.eq.s32.totalorder %s23, 0
      %p86 = por %p84, %p85
      %p87 = scmp.ne.s32.totalorder %s75, %s76
      %p88 = scmp.eq.s32.totalorder %s24, 1
      %p89 = por %p87, %p88
      %p91 = scmp.ne.s32.totalorder %s76, %s90
      %p92 = scmp.eq.s32.totalorder %s24, 0
      %p93 = por %p91, %p92
      %s95 = sadd.s32 %s94, 1
      %p98 = scmp.eq.s32.totalorder %s18, 1
      %p99 = scmp.ne.s32.totalorder %s94, %s96
      %p100 = scmp.eq.s32.totalorder %s18, 0
      %p101 = por %p99, %p100
      %p102 = scmp.ne.s32.totalorder %s94, %s96
      %p103 = scmp.eq.s32.totalorder %s23, 1
      %p104 = por %p102, %p103
      %p105 = scmp.ne.s32.totalorder %s96, %s97
      %p106 = scmp.eq.s32.totalorder %s23, 0
      %p107 = por %p105, %p106
      %p108 = scmp.ne.s32.totalorder %s96, %s97
      %p109 = scmp.eq.s32.totalorder %s24, 1
      %p110 = por %p108, %p109
      %p112 = scmp.ne.s32.totalorder %s97, %s111
      %p113 = scmp.eq.s32.totalorder %s24, 0
      %p114 = por %p112, %p113
      %s116 = sadd.s32 %s115, 1
      %p119 = scmp.eq.s32.totalorder %s18, 1
      %p120 = scmp.ne.s32.totalorder %s115, %s117
      %p121 = scmp.eq.s32.totalorder %s18, 0
      %p122 = por %p120, %p121
      %p123 = scmp.ne.s32.totalorder %s115, %s117
      %p124 = scmp.eq.s32.totalorder %s23, 1
      %p125 = por %p123, %p124
      %p126 = scmp.ne.s32.totalorder %s117, %s118
      %p127 = scmp.eq.s32.totalorder %s23, 0
      %p128 = por %p126, %p127
      %p129 = scmp.ne.s32.totalorder %s117, %s118
      %p130 = scmp.eq.s32.totalorder %s24, 1
      %p131 = por %p129, %p130
      %p133 = scmp.ne.s32.totalorder %s118, %s132
      %p134 = scmp.eq.s32.totalorder %s24, 0
      %p135 = por %p133, %p134
      %s136 = ssub.s32 %s18, %s25
      %p137 = scmp.eq.s32.totalorder %s136, 0
      %s139 = sadd.s32 %s138, 1
      %s140 = scalar_select %p137, %s138, %s139
      %p143 = pneg %p137
      %p144 = scmp.eq.s32.totalorder %s18, 1
      %p145 = por %p143, %p144
      %p146 = scmp.ne.s32.totalorder %s138, %s141
      %p147 = scmp.eq.s32.totalorder %s18, 0
      %p148 = por %p146, %p147
      %p149 = scmp.ne.s32.totalorder %s138, %s141
      %p150 = scmp.eq.s32.totalorder %s23, 1
      %p151 = por %p149, %p150
      %p152 = scmp.ne.s32.totalorder %s141, %s142
      %p153 = scmp.eq.s32.totalorder %s23, 0
      %p154 = por %p152, %p153
      %p155 = scmp.ne.s32.totalorder %s141, %s142
      %p156 = scmp.eq.s32.totalorder %s24, 1
      %p157 = por %p155, %p156
      %p159 = scmp.ne.s32.totalorder %s142, %s158
      %p160 = scmp.eq.s32.totalorder %s24, 0
      %p161 = por %p159, %p160
      %p162 = scmp.le.s32.totalorder 1, %s18
      %p163 = scmp.lt.s32.totalorder %s18, 3
      %p164 = pnand %p162, %p163
      %p165 = pneg %p164
      // Predicated region
      $region9: #{tpu_custom_call.1} parent=5 // pred_check
        _
      $region10: #{tpu_custom_call.1} parent=5 // pred_check_branch
        %167 = sbr.rel (%p164) target = $region12
      $region11: #{tpu_custom_call.1} parent=5 // pred_region
        %s168 = ssub.s32 %s18, 1
        // Predicated region
        $region13: #{tpu_custom_call.1} parent=11 // pred_check
          %p169 = pneg %p65
        $region14: #{tpu_custom_call.1} parent=11 // pred_check_branch
          %171 = sbr.rel (%p169) target = $region16
        $region15: #{tpu_custom_call.1} parent=11 // pred_region
          %s173 = ssub.s32 256, 256
          %174 = vsyncadd [#allocation6], %s173
          %s175 = sshll.u32 [#allocation5], 4
          %s176 = int_to_ptr.vmem [resolvable:$true] %s175
          %181 = dma.hbm_to_vmem [thread:$0]  %s1, 256, %s176, [#allocation6], 64, 64, 4
        $region16: #{tpu_custom_call.1} parent=11 // pred_fallthru
          _
        // Predicated region
        $region17: #{tpu_custom_call.1} parent=11 // pred_check
          %p182 = pneg %p86
        $region18: #{tpu_custom_call.1} parent=11 // pred_check_branch
          %184 = sbr.rel (%p182) target = $region20
        $region19: #{tpu_custom_call.1} parent=11 // pred_region
          _
        $region20: #{tpu_custom_call.1} parent=11 // pred_fallthru
          _
        // Predicated region
        $region21: #{tpu_custom_call.1} parent=11 // pred_check
          %p185 = pneg %p107
        $region22: #{tpu_custom_call.1} parent=11 // pred_check_branch
          %187 = sbr.rel (%p185) target = $region24
        $region23: #{tpu_custom_call.1} parent=11 // pred_region
          %s189 = ssub.s32 256, 256
          %190 = vsyncadd [#allocation6], %s189
          %s191 = sshll.u32 [#allocation7], 4
          %s192 = int_to_ptr.vmem [resolvable:$true] %s191
          %197 = dma.hbm_to_vmem [thread:$0]  %s3, 256, %s192, [#allocation6], 64, 64, 4
        $region24: #{tpu_custom_call.1} parent=11 // pred_fallthru
          _
        // Predicated region
        $region25: #{tpu_custom_call.1} parent=11 // pred_check
          %p198 = pneg %p128
        $region26: #{tpu_custom_call.1} parent=11 // pred_check_branch
          %200 = sbr.rel (%p198) target = $region28
        $region27: #{tpu_custom_call.1} parent=11 // pred_region
          _
        $region28: #{tpu_custom_call.1} parent=11 // pred_fallthru
          _
      $region12: #{tpu_custom_call.1} parent=5 // pred_fallthru
        _
      %p201 = scmp.lt.s32.totalorder %s18, 2
      // Predicated region
      $region29: #{tpu_custom_call.1} parent=5 // pred_check
        %p202 = pneg %p201
      $region30: #{tpu_custom_call.1} parent=5 // pred_check_branch
        %204 = sbr.rel (%p202) target = $region32
      $region31: #{tpu_custom_call.1} parent=5 // pred_region
        // Predicated region
        $region33: #{tpu_custom_call.1} parent=31 // pred_check
          %p205 = pneg %p38
        $region34: #{tpu_custom_call.1} parent=31 // pred_check_branch
          %207 = sbr.rel (%p205) target = $region36
        $region35: #{tpu_custom_call.1} parent=31 // pred_region
          %s208 = sand.u32 %s28, 1
          %s209 = scalar_lea.sflag [#allocation3], %s208
          %s210 = sand.u32 %s28, 1
          %s211 = smul.addr %s210, 8
          %s212 = scalar_lea.vmem [#allocation2], %s211
          %s213 = smul.u32 2, %s18
          %s215 = ssub.s32 128, 128
          %216 = vsyncadd %s209, %s215
          %s217 = smul.addr %s213, 64
          %s218 = scalar_lea.hbm %s0, %s217
          %s219 = sshll.u32 %s212, 4
          %s220 = int_to_ptr.vmem [resolvable:$true] %s219
          %225 = dma.hbm_to_vmem [thread:$0]  %s218, 128, %s220, %s209, 64, 64, 4
        $region36: #{tpu_custom_call.1} parent=31 // pred_fallthru
          _
      $region32: #{tpu_custom_call.1} parent=5 // pred_fallthru
        _
      %p226 = scmp.le.s32.totalorder 1, %s18
      %p227 = scmp.lt.s32.totalorder %s18, 3
      %p228 = pnand %p226, %p227
      %p229 = pneg %p228
      // Predicated region
      $region37: #{tpu_custom_call.1} parent=5 // pred_check
        _
      $region38: #{tpu_custom_call.1} parent=5 // pred_check_branch
        %231 = sbr.rel (%p228) target = $region40
      $region39: #{tpu_custom_call.1} parent=5 // pred_region
        %s232 = ssub.s32 %s18, 1
        %s233 = sand.u32 %s31, 1
        %s234 = scalar_lea.sflag [#allocation3], %s233
        %s235 = sand.u32 %s31, 1
        %s236 = smul.addr %s235, 8
        %s237 = scalar_lea.vmem [#allocation2], %s236
        // Predicated region
        $region41: #{tpu_custom_call.1} parent=39 // pred_check
          %p238 = pneg %p44
        $region42: #{tpu_custom_call.1} parent=39 // pred_check_branch
          %240 = sbr.rel (%p238) target = $region44
        $region43: #{tpu_custom_call.1} parent=39 // pred_region
          %241 = dma.done %s234, 128
        $region44: #{tpu_custom_call.1} parent=39 // pred_fallthru
          _
        // Predicated region
        $region45: #{tpu_custom_call.1} parent=39 // pred_check
          %p242 = pneg %p65
        $region46: #{tpu_custom_call.1} parent=39 // pred_check_branch
          %244 = sbr.rel (%p242) target = $region48
        $region47: #{tpu_custom_call.1} parent=39 // pred_region
          %245 = dma.done [#allocation6], 256
        $region48: #{tpu_custom_call.1} parent=39 // pred_fallthru
          _
        // Predicated region
        $region49: #{tpu_custom_call.1} parent=39 // pred_check
          %p246 = pneg %p107
        $region50: #{tpu_custom_call.1} parent=39 // pred_check_branch
          %248 = sbr.rel (%p246) target = $region52
        $region51: #{tpu_custom_call.1} parent=39 // pred_region
          %249 = dma.done [#allocation6], 256
        $region52: #{tpu_custom_call.1} parent=39 // pred_fallthru
          _
        %s250 = sand.u32 %s31, 1
        %s251 = scalar_lea.sflag [#allocation3], %s250
        %s252 = sand.u32 %s31, 1
        %s253 = smul.addr %s252, 8
        %s254 = scalar_lea.vmem [#allocation2], %s253
        %p255 = pneg %p44
        %p256 = pneg %p41
        %p257 = pneg %p65
        %p258 = pneg %p62
        %p259 = pneg %p86
        %p260 = pneg %p83
        %p261 = pneg %p107
        %p262 = pneg %p104
        %p263 = pneg %p128
        %p264 = pneg %p125
        %p265 = pneg %p154
        %p266 = pneg %p151
        %s267 = sand.u32 %s141, 1
        %s268 = scalar_lea.sflag [#allocation4], %s267
        %s269 = sand.u32 %s141, 1
        %s270 = smul.addr %s269, 16
        %s271 = scalar_lea.vmem [#allocation8], %s270
        %s272 = smul.u32 2, %s23
        %s273 = smul.u32 2, %s23
        %v275 = vld [vmem:[%s237] sm:$0xf]
        %v276 = vld [vmem:[%s237 + $0x4] sm:$0xf]
        %v277 = vld [vmem:[#allocation5] sm:$0xf]
        %v278 = vld [vmem:[#allocation5 + $0x4] sm:$0xf]
        %v279 = vld [vmem:[#allocation5 + $0x8] sm:$0xf]
        %v280 = vld [vmem:[#allocation5 + $0xc] sm:$0xf]
        %v281 = vld [vmem:[%s2] sm:$0x1]
        %v283 = vlaneseq
        %v284 = vshrl.u32 %v283, 7
        %v285 = vsub.s32 0, %v284
        %v286 = vrot.slane %v281, %v285
        %v290 = vunpack.c.l.b16 %v275
        %v291 = vunpack.c.l.b16 %v276
        %v292 = vpack.c.b16 %v291, %v290
        %v297 = vunpack.c.l.b16 %v277
        %v298 = vunpack.c.l.b16 %v278
        %v299 = vunpack.c.l.b16 %v279
        %v300 = vunpack.c.l.b16 %v280
        %v301 = vpack.c.b16 %v298, %v297
        %v302 = vpack.c.b16 %v300, %v299
        %vm305 = vcmask 261120
        %v307 = vsel %vm305, %v292, 0
        %309 = vmatprep.subr.bf16.mxu0 0
        %310 = vmatpush1.bf16.msra.mxu0 %v301
        %311 = vmatprep.subr.bf16.mxu0 0
        %312 = vmatpush1.bf16.msra.mxu0 %v302
        %313 = vmatprep.subr.bf16.mxu0 0
        %314 = vmatpush1.bf16.msra.mxu0 0
        %315 = vmatprep.subr.bf16.mxu0 0
        %316 = vmatpush1.bf16.msra.mxu0 0
        %317 = vmatprep.subr.bf16.mxu0 0
        %318 = vmatpush1.bf16.msra.mxu0 0
        %319 = vmatprep.subr.bf16.mxu0 0
        %320 = vmatpush1.bf16.msra.mxu0 0
        %321 = vmatprep.subr.bf16.mxu0 0
        %322 = vmatpush1.bf16.msra.mxu0 0
        %323 = vmatprep.subr.bf16.mxu0 0
        %324 = vmatpush1.bf16.msra.mxu0 0
        %325 = vmatprep.subr.bf16.mxu0 0
        %326 = vmatpush1.bf16.msra.mxu0 0
        %327 = vmatprep.subr.bf16.mxu0 0
        %328 = vmatpush1.bf16.msra.mxu0 0
        %329 = vmatprep.subr.bf16.mxu0 0
        %330 = vmatpush1.bf16.msra.mxu0 0
        %331 = vmatprep.subr.bf16.mxu0 0
        %332 = vmatpush1.bf16.msra.mxu0 0
        %333 = vmatprep.subr.bf16.mxu0 0
        %334 = vmatpush1.bf16.msra.mxu0 0
        %335 = vmatprep.subr.bf16.mxu0 0
        %336 = vmatpush1.bf16.msra.mxu0 0
        %337 = vmatprep.subr.bf16.mxu0 0
        %338 = vmatpush1.bf16.msra.mxu0 0
        %339 = vmatprep.subr.bf16.mxu0 0
        %340 = vmatpush1.bf16.msra.mxu0 0
        %341 = vmatprep.mubr.bf16.mxu0 0
        %342 = vmatmul.mubr.bf16.gmra.mrb[0].mxu0 %v307
        %v343 = vpop.f32.mrb[0].mxu0
        %v344 = vadd.f32 %v286, %v343
        %v345 = vpop.f32.mrb[0].mxu0
        %v346 = vpop.f32.mrb[0].mxu0
        %v347 = vadd.f32 %v286, %v346
        %v348 = vpop.f32.mrb[0].mxu0
        %349 = vdwg.mxu0
        %v350 = vlaneseq
        %v351 = vshrl.u32 %v350, 7
        %v352 = vlaneseq
        %v353 = vand.u32 %v352, 127
        %vm354 = vcmp.ge.s32.totalorder %v351, %v353
        %v355 = vpack.c.bf16 %v344, %v344
        %v356 = vpack.c.bf16 %v347, %v347
        %358 = vrot.lane.b32.xlu0 %v355, 96
        %v359 = vpop.permute.xlu0 %358
        %vm360 = vcmask 64512
        %v362 = vsel %vm360, %v355, 0
        %v365 = vsel %vm360, %v359, 0
        %367 = vmatprep.subr.bf16.mxu0 0
        %368 = vmatpush1.bf16.xpose.msra.mxu0 %v365
        %369 = vmatprep.subr.bf16.mxu0 0
        %370 = vmatpush1.bf16.xpose.msra.mxu0 0
        %371 = vmatprep.subr.bf16.mxu0 0
        %372 = vmatpush1.bf16.xpose.msra.mxu0 0
        %373 = vmatprep.subr.bf16.mxu0 0
        %374 = vmatpush1.bf16.xpose.msra.mxu0 0
        %375 = vmatprep.subr.bf16.mxu0 0
        %376 = vmatpush1.bf16.xpose.msra.mxu0 0
        %377 = vmatprep.subr.bf16.mxu0 0
        %378 = vmatpush1.bf16.xpose.msra.mxu0 0
        %379 = vmatprep.subr.bf16.mxu0 0
        %380 = vmatpush1.bf16.xpose.msra.mxu0 0
        %381 = vmatprep.subr.bf16.mxu0 0
        %382 = vmatpush1.bf16.xpose.msra.mxu0 0
        %383 = vmatprep.subr.bf16.mxu0 0
        %384 = vmatpush1.bf16.xpose.msra.mxu0 0
        %385 = vmatprep.subr.bf16.mxu0 0
        %386 = vmatpush1.bf16.xpose.msra.mxu0 0
        %387 = vmatprep.subr.bf16.mxu0 0
        %388 = vmatpush1.bf16.xpose.msra.mxu0 0
        %389 = vmatprep.subr.bf16.mxu0 0
        %390 = vmatpush1.bf16.xpose.msra.mxu0 0
        %391 = vmatprep.subr.bf16.mxu0 0
        %392 = vmatpush1.bf16.xpose.msra.mxu0 0
        %393 = vmatprep.subr.bf16.mxu0 0
        %394 = vmatpush1.bf16.xpose.msra.mxu0 0
        %395 = vmatprep.subr.bf16.mxu0 0
        %396 = vmatpush1.bf16.xpose.msra.mxu0 0
        %397 = vmatprep.subr.bf16.mxu0 0
        %398 = vmatpush1.bf16.xpose.msra.mxu0 0
        %399 = vmatprep.mubr.bf16.mxu0 0
        %400 = vmatmul.mubr.bf16.gmra.mrb[0].mxu0 %v362
        %v401 = vpop.f32.mrb[0].mxu0
        %v402 = vadd.f32 0.0, %v401
        %v403 = vpop.f32.mrb[0].mxu0
        %v404 = vpop.f32.mrb[0].mxu0
        %v405 = vpop.f32.mrb[0].mxu0
        %406 = vdwg.mxu0
        %408 = vrot.lane.b32.xlu0 %v356, 96
        %v409 = vpop.permute.xlu0 %408
        %v411 = vsel %vm360, %v356, 0
        %v414 = vsel %vm360, %v409, 0
        %416 = vmatprep.subr.bf16.mxu0 0
        %417 = vmatpush1.bf16.xpose.msra.mxu0 %v414
        %418 = vmatprep.subr.bf16.mxu0 0
        %419 = vmatpush1.bf16.xpose.msra.mxu0 0
        %420 = vmatprep.subr.bf16.mxu0 0
        %421 = vmatpush1.bf16.xpose.msra.mxu0 0
        %422 = vmatprep.subr.bf16.mxu0 0
        %423 = vmatpush1.bf16.xpose.msra.mxu0 0
        %424 = vmatprep.subr.bf16.mxu0 0
        %425 = vmatpush1.bf16.xpose.msra.mxu0 0
        %426 = vmatprep.subr.bf16.mxu0 0
        %427 = vmatpush1.bf16.xpose.msra.mxu0 0
        %428 = vmatprep.subr.bf16.mxu0 0
        %429 = vmatpush1.bf16.xpose.msra.mxu0 0
        %430 = vmatprep.subr.bf16.mxu0 0
        %431 = vmatpush1.bf16.xpose.msra.mxu0 0
        %432 = vmatprep.subr.bf16.mxu0 0
        %433 = vmatpush1.bf16.xpose.msra.mxu0 0
        %434 = vmatprep.subr.bf16.mxu0 0
        %435 = vmatpush1.bf16.xpose.msra.mxu0 0
        %436 = vmatprep.subr.bf16.mxu0 0
        %437 = vmatpush1.bf16.xpose.msra.mxu0 0
        %438 = vmatprep.subr.bf16.mxu0 0
        %439 = vmatpush1.bf16.xpose.msra.mxu0 0
        %440 = vmatprep.subr.bf16.mxu0 0
        %441 = vmatpush1.bf16.xpose.msra.mxu0 0
        %442 = vmatprep.subr.bf16.mxu0 0
        %443 = vmatpush1.bf16.xpose.msra.mxu0 0
        %444 = vmatprep.subr.bf16.mxu0 0
        %445 = vmatpush1.bf16.xpose.msra.mxu0 0
        %446 = vmatprep.subr.bf16.mxu0 0
        %447 = vmatpush1.bf16.xpose.msra.mxu0 0
        %448 = vmatprep.mubr.bf16.mxu0 0
        %449 = vmatmul.mubr.bf16.gmra.mrb[0].mxu0 %v411
        %v450 = vpop.f32.mrb[0].mxu0
        %v451 = vadd.f32 0.0, %v450
        %v452 = vpop.f32.mrb[0].mxu0
        %v453 = vpop.f32.mrb[0].mxu0
        %v454 = vpop.f32.mrb[0].mxu0
        %455 = vdwg.mxu0
        %v456 = vsel %vm354, 1, 0
        %vm457 = vcmp.eq.s32.totalorder %v456, 1
        %v458 = vsel %vm457, %v402, -1e+30
        %v459 = vsel %vm457, %v451, -1e+30
        %v460 = vsel %vm360, %v458, -inf
        %461 = vmax.xlane.f32.xlu0 %v460
        %v462 = vpop.xlane.xlu0 %461
        %v463 = vsel %vm360, %v459, -inf
        %464 = vmax.xlane.f32.xlu0 %v463
        %v465 = vpop.xlane.xlu0 %464
        %v466 = vsub.f32 %v458, %v462
        %v467 = vsub.f32 %v459, %v465
        %v468 = vmul.f32 %v466, 1.442695
        %v469 = vpow.pop %v468
        %v470 = vmul.f32 %v467, 1.442695
        %v471 = vpow.pop %v470
        %v472 = vsel %vm360, %v469, 0.0
        %473 = vadd.xlane.f32.xlu0 %v472
        %v474 = vpop.xlane.xlu0 %473
        %v475 = vsel %vm360, %v471, 0.0
        %476 = vadd.xlane.f32.xlu0 %v475
        %v477 = vpop.xlane.xlu0 %476
        %v478 = vrcp.pop %v474
        %v479 = vrcp.pop %v477
        %v480 = vmul.f32 %v469, %v478
        %v481 = vmul.f32 %v471, %v479
        %v482 = vpack.c.bf16 %v480, %v480
        %v483 = vpack.c.bf16 %v481, %v481
        %484 = vrot.lane.b32.xlu0 %v355, 64
        %v485 = vpop.permute.xlu0 %484
        %v487 = vsel %vm360, %v482, 0
        %vm489 = vcmask 1043456
        %v491 = vsel %vm489, %v485, 0
        %493 = vmatprep.subr.bf16.mxu0 0
        %494 = vmatpush1.bf16.msra.mxu0 %v491
        %495 = vmatprep.subr.bf16.mxu0 0
        %496 = vmatpush1.bf16.msra.mxu0 0
        %497 = vmatprep.subr.bf16.mxu0 0
        %498 = vmatpush1.bf16.msra.mxu0 0
        %499 = vmatprep.subr.bf16.mxu0 0
        %500 = vmatpush1.bf16.msra.mxu0 0
        %501 = vmatprep.subr.bf16.mxu0 0
        %502 = vmatpush1.bf16.msra.mxu0 0
        %503 = vmatprep.subr.bf16.mxu0 0
        %504 = vmatpush1.bf16.msra.mxu0 0
        %505 = vmatprep.subr.bf16.mxu0 0
        %506 = vmatpush1.bf16.msra.mxu0 0
        %507 = vmatprep.subr.bf16.mxu0 0
        %508 = vmatpush1.bf16.msra.mxu0 0
        %509 = vmatprep.subr.bf16.mxu0 0
        %510 = vmatpush1.bf16.msra.mxu0 0
        %511 = vmatprep.subr.bf16.mxu0 0
        %512 = vmatpush1.bf16.msra.mxu0 0
        %513 = vmatprep.subr.bf16.mxu0 0
        %514 = vmatpush1.bf16.msra.mxu0 0
        %515 = vmatprep.subr.bf16.mxu0 0
        %516 = vmatpush1.bf16.msra.mxu0 0
        %517 = vmatprep.subr.bf16.mxu0 0
        %518 = vmatpush1.bf16.msra.mxu0 0
        %519 = vmatprep.subr.bf16.mxu0 0
        %520 = vmatpush1.bf16.msra.mxu0 0
        %521 = vmatprep.subr.bf16.mxu0 0
        %522 = vmatpush1.bf16.msra.mxu0 0
        %523 = vmatprep.subr.bf16.mxu0 0
        %524 = vmatpush1.bf16.msra.mxu0 0
        %525 = vmatprep.mubr.bf16.mxu0 0
        %526 = vmatmul.mubr.bf16.gmra.mrb[0].mxu0 %v487
        %v527 = vpop.f32.mrb[0].mxu0
        %v528 = vadd.f32 0.0, %v527
        %v529 = vpop.f32.mrb[0].mxu0
        %v530 = vpop.f32.mrb[0].mxu0
        %v531 = vpop.f32.mrb[0].mxu0
        %532 = vdwg.mxu0
        %533 = vrot.lane.b32.xlu0 %v356, 64
        %v534 = vpop.permute.xlu0 %533
        %v536 = vsel %vm360, %v483, 0
        %v539 = vsel %vm489, %v534, 0
        %541 = vmatprep.subr.bf16.mxu0 0
        %542 = vmatpush1.bf16.msra.mxu0 %v539
        %543 = vmatprep.subr.bf16.mxu0 0
        %544 = vmatpush1.bf16.msra.mxu0 0
        %545 = vmatprep.subr.bf16.mxu0 0
        %546 = vmatpush1.bf16.msra.mxu0 0
        %547 = vmatprep.subr.bf16.mxu0 0
        %548 = vmatpush1.bf16.msra.mxu0 0
        %549 = vmatprep.subr.bf16.mxu0 0
        %550 = vmatpush1.bf16.msra.mxu0 0
        %551 = vmatprep.subr.bf16.mxu0 0
        %552 = vmatpush1.bf16.msra.mxu0 0
        %553 = vmatprep.subr.bf16.mxu0 0
        %554 = vmatpush1.bf16.msra.mxu0 0
        %555 = vmatprep.subr.bf16.mxu0 0
        %556 = vmatpush1.bf16.msra.mxu0 0
        %557 = vmatprep.subr.bf16.mxu0 0
        %558 = vmatpush1.bf16.msra.mxu0 0
        %559 = vmatprep.subr.bf16.mxu0 0
        %560 = vmatpush1.bf16.msra.mxu0 0
        %561 = vmatprep.subr.bf16.mxu0 0
        %562 = vmatpush1.bf16.msra.mxu0 0
        %563 = vmatprep.subr.bf16.mxu0 0
        %564 = vmatpush1.bf16.msra.mxu0 0
        %565 = vmatprep.subr.bf16.mxu0 0
        %566 = vmatpush1.bf16.msra.mxu0 0
        %567 = vmatprep.subr.bf16.mxu0 0
        %568 = vmatpush1.bf16.msra.mxu0 0
        %569 = vmatprep.subr.bf16.mxu0 0
        %570 = vmatpush1.bf16.msra.mxu0 0
        %571 = vmatprep.subr.bf16.mxu0 0
        %572 = vmatpush1.bf16.msra.mxu0 0
        %573 = vmatprep.mubr.bf16.mxu0 0
        %574 = vmatmul.mubr.bf16.gmra.mrb[0].mxu0 %v536
        %v575 = vpop.f32.mrb[0].mxu0
        %v576 = vadd.f32 0.0, %v575
        %v577 = vpop.f32.mrb[0].mxu0
        %v578 = vpop.f32.mrb[0].mxu0
        %v579 = vpop.f32.mrb[0].mxu0
        %580 = vdwg.mxu0
        %v581 = vpack.c.bf16 %v576, %v528
        %v582 = vld [vmem:[#allocation7] sm:$0xf]
        %583 = vrot.lane.b32.xlu0 %v355, 120
        %v584 = vpop.permute.xlu0 %583
        %585 = vrot.lane.b32.xlu0 %v355, 88
        %v586 = vpop.permute.xlu0 %585
        %v588 = vsel %vm360, %v584, 0
        %v591 = vsel %vm360, %v586, 0
        %593 = vmatprep.subr.bf16.mxu0 0
        %594 = vmatpush1.bf16.xpose.msra.mxu0 %v591
        %595 = vmatprep.subr.bf16.mxu0 0
        %596 = vmatpush1.bf16.xpose.msra.mxu0 0
        %597 = vmatprep.subr.bf16.mxu0 0
        %598 = vmatpush1.bf16.xpose.msra.mxu0 0
        %599 = vmatprep.subr.bf16.mxu0 0
        %600 = vmatpush1.bf16.xpose.msra.mxu0 0
        %601 = vmatprep.subr.bf16.mxu0 0
        %602 = vmatpush1.bf16.xpose.msra.mxu0 0
        %603 = vmatprep.subr.bf16.mxu0 0
        %604 = vmatpush1.bf16.xpose.msra.mxu0 0
        %605 = vmatprep.subr.bf16.mxu0 0
        %606 = vmatpush1.bf16.xpose.msra.mxu0 0
        %607 = vmatprep.subr.bf16.mxu0 0
        %608 = vmatpush1.bf16.xpose.msra.mxu0 0
        %609 = vmatprep.subr.bf16.mxu0 0
        %610 = vmatpush1.bf16.xpose.msra.mxu0 0
        %611 = vmatprep.subr.bf16.mxu0 0
        %612 = vmatpush1.bf16.xpose.msra.mxu0 0
        %613 = vmatprep.subr.bf16.mxu0 0
        %614 = vmatpush1.bf16.xpose.msra.mxu0 0
        %615 = vmatprep.subr.bf16.mxu0 0
        %616 = vmatpush1.bf16.xpose.msra.mxu0 0
        %617 = vmatprep.subr.bf16.mxu0 0
        %618 = vmatpush1.bf16.xpose.msra.mxu0 0
        %619 = vmatprep.subr.bf16.mxu0 0
        %620 = vmatpush1.bf16.xpose.msra.mxu0 0
        %621 = vmatprep.subr.bf16.mxu0 0
        %622 = vmatpush1.bf16.xpose.msra.mxu0 0
        %623 = vmatprep.subr.bf16.mxu0 0
        %624 = vmatpush1.bf16.xpose.msra.mxu0 0
        %625 = vmatprep.mubr.bf16.mxu0 0
        %626 = vmatmul.mubr.bf16.gmra.mrb[0].mxu0 %v588
        %v627 = vpop.f32.mrb[0].mxu0
        %v628 = vadd.f32 0.0, %v627
        %v629 = vpop.f32.mrb[0].mxu0
        %v630 = vpop.f32.mrb[0].mxu0
        %v631 = vpop.f32.mrb[0].mxu0
        %632 = vdwg.mxu0
        %633 = vrot.lane.b32.xlu0 %v356, 120
        %v634 = vpop.permute.xlu0 %633
        %635 = vrot.lane.b32.xlu0 %v356, 88
        %v636 = vpop.permute.xlu0 %635
        %v638 = vsel %vm360, %v634, 0
        %v641 = vsel %vm360, %v636, 0
        %643 = vmatprep.subr.bf16.mxu0 0
        %644 = vmatpush1.bf16.xpose.msra.mxu0 %v641
        %645 = vmatprep.subr.bf16.mxu0 0
        %646 = vmatpush1.bf16.xpose.msra.mxu0 0
        %647 = vmatprep.subr.bf16.mxu0 0
        %648 = vmatpush1.bf16.xpose.msra.mxu0 0
        %649 = vmatprep.subr.bf16.mxu0 0
        %650 = vmatpush1.bf16.xpose.msra.mxu0 0
        %651 = vmatprep.subr.bf16.mxu0 0
        %652 = vmatpush1.bf16.xpose.msra.mxu0 0
        %653 = vmatprep.subr.bf16.mxu0 0
        %654 = vmatpush1.bf16.xpose.msra.mxu0 0
        %655 = vmatprep.subr.bf16.mxu0 0
        %656 = vmatpush1.bf16.xpose.msra.mxu0 0
        %657 = vmatprep.subr.bf16.mxu0 0
        %658 = vmatpush1.bf16.xpose.msra.mxu0 0
        %659 = vmatprep.subr.bf16.mxu0 0
        %660 = vmatpush1.bf16.xpose.msra.mxu0 0
        %661 = vmatprep.subr.bf16.mxu0 0
        %662 = vmatpush1.bf16.xpose.msra.mxu0 0
        %663 = vmatprep.subr.bf16.mxu0 0
        %664 = vmatpush1.bf16.xpose.msra.mxu0 0
        %665 = vmatprep.subr.bf16.mxu0 0
        %666 = vmatpush1.bf16.xpose.msra.mxu0 0
        %667 = vmatprep.subr.bf16.mxu0 0
        %668 = vmatpush1.bf16.xpose.msra.mxu0 0
        %669 = vmatprep.subr.bf16.mxu0 0
        %670 = vmatpush1.bf16.xpose.msra.mxu0 0
        %671 = vmatprep.subr.bf16.mxu0 0
        %672 = vmatpush1.bf16.xpose.msra.mxu0 0
        %673 = vmatprep.subr.bf16.mxu0 0
        %674 = vmatpush1.bf16.xpose.msra.mxu0 0
        %675 = vmatprep.mubr.bf16.mxu0 0
        %676 = vmatmul.mubr.bf16.gmra.mrb[0].mxu0 %v638
        %v677 = vpop.f32.mrb[0].mxu0
        %v678 = vadd.f32 0.0, %v677
        %v679 = vpop.f32.mrb[0].mxu0
        %v680 = vpop.f32.mrb[0].mxu0
        %v681 = vpop.f32.mrb[0].mxu0
        %682 = vdwg.mxu0
        %v683 = vsel %vm457, %v628, -1e+30
        %v684 = vsel %vm457, %v678, -1e+30
        %v685 = vsel %vm360, %v683, -inf
        %686 = vmax.xlane.f32.xlu0 %v685
        %v687 = vpop.xlane.xlu0 %686
        %v688 = vsel %vm360, %v684, -inf
        %689 = vmax.xlane.f32.xlu0 %v688
        %v690 = vpop.xlane.xlu0 %689
        %v691 = vsub.f32 %v683, %v687
        %v692 = vsub.f32 %v684, %v690
        %v693 = vmul.f32 %v691, 1.442695
        %v694 = vpow.pop %v693
        %v695 = vmul.f32 %v692, 1.442695
        %v696 = vpow.pop %v695
        %v697 = vsel %vm360, %v694, 0.0
        %698 = vadd.xlane.f32.xlu0 %v697
        %v699 = vpop.xlane.xlu0 %698
        %v700 = vsel %vm360, %v696, 0.0
        %701 = vadd.xlane.f32.xlu0 %v700
        %v702 = vpop.xlane.xlu0 %701
        %v703 = vrcp.pop %v699
        %v704 = vrcp.pop %v702
        %v705 = vmul.f32 %v694, %v703
        %v706 = vmul.f32 %v696, %v704
        %v707 = vpack.c.bf16 %v705, %v705
        %v708 = vpack.c.bf16 %v706, %v706
        %709 = vrot.lane.b32.xlu0 %v355, 56
        %v710 = vpop.permute.xlu0 %709
        %v712 = vsel %vm360, %v707, 0
        %v715 = vsel %vm489, %v710, 0
        %717 = vmatprep.subr.bf16.mxu0 0
        %718 = vmatpush1.bf16.msra.mxu0 %v715
        %719 = vmatprep.subr.bf16.mxu0 0
        %720 = vmatpush1.bf16.msra.mxu0 0
        %721 = vmatprep.subr.bf16.mxu0 0
        %722 = vmatpush1.bf16.msra.mxu0 0
        %723 = vmatprep.subr.bf16.mxu0 0
        %724 = vmatpush1.bf16.msra.mxu0 0
        %725 = vmatprep.subr.bf16.mxu0 0
        %726 = vmatpush1.bf16.msra.mxu0 0
        %727 = vmatprep.subr.bf16.mxu0 0
        %728 = vmatpush1.bf16.msra.mxu0 0
        %729 = vmatprep.subr.bf16.mxu0 0
        %730 = vmatpush1.bf16.msra.mxu0 0
        %731 = vmatprep.subr.bf16.mxu0 0
        %732 = vmatpush1.bf16.msra.mxu0 0
        %733 = vmatprep.subr.bf16.mxu0 0
        %734 = vmatpush1.bf16.msra.mxu0 0
        %735 = vmatprep.subr.bf16.mxu0 0
        %736 = vmatpush1.bf16.msra.mxu0 0
        %737 = vmatprep.subr.bf16.mxu0 0
        %738 = vmatpush1.bf16.msra.mxu0 0
        %739 = vmatprep.subr.bf16.mxu0 0
        %740 = vmatpush1.bf16.msra.mxu0 0
        %741 = vmatprep.subr.bf16.mxu0 0
        %742 = vmatpush1.bf16.msra.mxu0 0
        %743 = vmatprep.subr.bf16.mxu0 0
        %744 = vmatpush1.bf16.msra.mxu0 0
        %745 = vmatprep.subr.bf16.mxu0 0
        %746 = vmatpush1.bf16.msra.mxu0 0
        %747 = vmatprep.subr.bf16.mxu0 0
        %748 = vmatpush1.bf16.msra.mxu0 0
        %749 = vmatprep.mubr.bf16.mxu0 0
        %750 = vmatmul.mubr.bf16.gmra.mrb[0].mxu0 %v712
        %v751 = vpop.f32.mrb[0].mxu0
        %v752 = vadd.f32 0.0, %v751
        %v753 = vpop.f32.mrb[0].mxu0
        %v754 = vpop.f32.mrb[0].mxu0
        %v755 = vpop.f32.mrb[0].mxu0
        %756 = vdwg.mxu0
        %757 = vrot.lane.b32.xlu0 %v356, 56
        %v758 = vpop.permute.xlu0 %757
        %v760 = vsel %vm360, %v708, 0
        %v763 = vsel %vm489, %v758, 0
        %765 = vmatprep.subr.bf16.mxu0 0
        %766 = vmatpush1.bf16.msra.mxu0 %v763
        %767 = vmatprep.subr.bf16.mxu0 0
        %768 = vmatpush1.bf16.msra.mxu0 0
        %769 = vmatprep.subr.bf16.mxu0 0
        %770 = vmatpush1.bf16.msra.mxu0 0
        %771 = vmatprep.subr.bf16.mxu0 0
        %772 = vmatpush1.bf16.msra.mxu0 0
        %773 = vmatprep.subr.bf16.mxu0 0
        %774 = vmatpush1.bf16.msra.mxu0 0
        %775 = vmatprep.subr.bf16.mxu0 0
        %776 = vmatpush1.bf16.msra.mxu0 0
        %777 = vmatprep.subr.bf16.mxu0 0
        %778 = vmatpush1.bf16.msra.mxu0 0
        %779 = vmatprep.subr.bf16.mxu0 0
        %780 = vmatpush1.bf16.msra.mxu0 0
        %781 = vmatprep.subr.bf16.mxu0 0
        %782 = vmatpush1.bf16.msra.mxu0 0
        %783 = vmatprep.subr.bf16.mxu0 0
        %784 = vmatpush1.bf16.msra.mxu0 0
        %785 = vmatprep.subr.bf16.mxu0 0
        %786 = vmatpush1.bf16.msra.mxu0 0
        %787 = vmatprep.subr.bf16.mxu0 0
        %788 = vmatpush1.bf16.msra.mxu0 0
        %789 = vmatprep.subr.bf16.mxu0 0
        %790 = vmatpush1.bf16.msra.mxu0 0
        %791 = vmatprep.subr.bf16.mxu0 0
        %792 = vmatpush1.bf16.msra.mxu0 0
        %793 = vmatprep.subr.bf16.mxu0 0
        %794 = vmatpush1.bf16.msra.mxu0 0
        %795 = vmatprep.subr.bf16.mxu0 0
        %796 = vmatpush1.bf16.msra.mxu0 0
        %797 = vmatprep.mubr.bf16.mxu0 0
        %798 = vmatmul.mubr.bf16.gmra.mrb[0].mxu0 %v760
        %v799 = vpop.f32.mrb[0].mxu0
        %v800 = vadd.f32 0.0, %v799
        %v801 = vpop.f32.mrb[0].mxu0
        %v802 = vpop.f32.mrb[0].mxu0
        %v803 = vpop.f32.mrb[0].mxu0
        %804 = vdwg.mxu0
        %v805 = vpack.c.bf16 %v800, %v752
        %v806 = vld [vmem:[#allocation7 + $0x4] sm:$0xf]
        %v808 = vsel %vm360, %v805, 0
        %v811 = vsel %vm489, %v806, 0
        %813 = vmatprep.subr.bf16.mxu0 0
        %814 = vmatpush1.bf16.msra.mxu0 %v811
        %815 = vmatprep.subr.bf16.mxu0 0
        %816 = vmatpush1.bf16.msra.mxu0 0
        %817 = vmatprep.subr.bf16.mxu0 0
        %818 = vmatpush1.bf16.msra.mxu0 0
        %819 = vmatprep.subr.bf16.mxu0 0
        %820 = vmatpush1.bf16.msra.mxu0 0
        %821 = vmatprep.subr.bf16.mxu0 0
        %822 = vmatpush1.bf16.msra.mxu0 0
        %823 = vmatprep.subr.bf16.mxu0 0
        %824 = vmatpush1.bf16.msra.mxu0 0
        %825 = vmatprep.subr.bf16.mxu0 0
        %826 = vmatpush1.bf16.msra.mxu0 0
        %827 = vmatprep.subr.bf16.mxu0 0
        %828 = vmatpush1.bf16.msra.mxu0 0
        %829 = vmatprep.subr.bf16.mxu0 0
        %830 = vmatpush1.bf16.msra.mxu0 0
        %831 = vmatprep.subr.bf16.mxu0 0
        %832 = vmatpush1.bf16.msra.mxu0 0
        %833 = vmatprep.subr.bf16.mxu0 0
        %834 = vmatpush1.bf16.msra.mxu0 0
        %835 = vmatprep.subr.bf16.mxu0 0
        %836 = vmatpush1.bf16.msra.mxu0 0
        %837 = vmatprep.subr.bf16.mxu0 0
        %838 = vmatpush1.bf16.msra.mxu0 0
        %839 = vmatprep.subr.bf16.mxu0 0
        %840 = vmatpush1.bf16.msra.mxu0 0
        %841 = vmatprep.subr.bf16.mxu0 0
        %842 = vmatpush1.bf16.msra.mxu0 0
        %843 = vmatprep.subr.bf16.mxu0 0
        %844 = vmatpush1.bf16.msra.mxu0 0
        %845 = vmatprep.mubr.bf16.mxu0 0
        %846 = vmatmul.mubr.bf16.gmra.mrb[0].mxu0 %v808
        %v847 = vpop.f32.mrb[0].mxu0
        %v848 = vadd.f32 0.0, %v847
        %v849 = vpop.f32.mrb[0].mxu0
        %v850 = vpop.f32.mrb[0].mxu0
        %v851 = vadd.f32 0.0, %v850
        %v852 = vpop.f32.mrb[0].mxu0
        %853 = vdwg.mxu0
        %v855 = vsel %vm360, %v581, 0
        %v858 = vsel %vm489, %v582, 0
        %860 = vmatprep.subr.bf16.mxu0 0
        %861 = vmatpush1.bf16.msra.mxu0 %v858
        %862 = vmatprep.subr.bf16.mxu0 0
        %863 = vmatpush1.bf16.msra.mxu0 0
        %864 = vmatprep.subr.bf16.mxu0 0
        %865 = vmatpush1.bf16.msra.mxu0 0
        %866 = vmatprep.subr.bf16.mxu0 0
        %867 = vmatpush1.bf16.msra.mxu0 0
        %868 = vmatprep.subr.bf16.mxu0 0
        %869 = vmatpush1.bf16.msra.mxu0 0
        %870 = vmatprep.subr.bf16.mxu0 0
        %871 = vmatpush1.bf16.msra.mxu0 0
        %872 = vmatprep.subr.bf16.mxu0 0
        %873 = vmatpush1.bf16.msra.mxu0 0
        %874 = vmatprep.subr.bf16.mxu0 0
        %875 = vmatpush1.bf16.msra.mxu0 0
        %876 = vmatprep.subr.bf16.mxu0 0
        %877 = vmatpush1.bf16.msra.mxu0 0
        %878 = vmatprep.subr.bf16.mxu0 0
        %879 = vmatpush1.bf16.msra.mxu0 0
        %880 = vmatprep.subr.bf16.mxu0 0
        %881 = vmatpush1.bf16.msra.mxu0 0
        %882 = vmatprep.subr.bf16.mxu0 0
        %883 = vmatpush1.bf16.msra.mxu0 0
        %884 = vmatprep.subr.bf16.mxu0 0
        %885 = vmatpush1.bf16.msra.mxu0 0
        %886 = vmatprep.subr.bf16.mxu0 0
        %887 = vmatpush1.bf16.msra.mxu0 0
        %888 = vmatprep.subr.bf16.mxu0 0
        %889 = vmatpush1.bf16.msra.mxu0 0
        %890 = vmatprep.subr.bf16.mxu0 0
        %891 = vmatpush1.bf16.msra.mxu0 0
        %892 = vmatprep.mubr.bf16.mxu0 0
        %893 = vmatmul.mubr.bf16.gmra.mrb[0].mxu0 %v855
        %v894 = vpop.f32.mrb[0].mxu0
        %v895 = vadd.f32 %v848, %v894
        %v896 = vpop.f32.mrb[0].mxu0
        %v897 = vpop.f32.mrb[0].mxu0
        %v898 = vadd.f32 %v851, %v897
        %v899 = vpop.f32.mrb[0].mxu0
        %900 = vdwg.mxu0
        %901 = vrot.lane.b32.xlu0 %v355, 112
        %v902 = vpop.permute.xlu0 %901
        %903 = vrot.lane.b32.xlu0 %v355, 80
        %v904 = vpop.permute.xlu0 %903
        %v906 = vsel %vm360, %v902, 0
        %v909 = vsel %vm360, %v904, 0
        %911 = vmatprep.subr.bf16.mxu0 0
        %912 = vmatpush1.bf16.xpose.msra.mxu0 %v909
        %913 = vmatprep.subr.bf16.mxu0 0
        %914 = vmatpush1.bf16.xpose.msra.mxu0 0
        %915 = vmatprep.subr.bf16.mxu0 0
        %916 = vmatpush1.bf16.xpose.msra.mxu0 0
        %917 = vmatprep.subr.bf16.mxu0 0
        %918 = vmatpush1.bf16.xpose.msra.mxu0 0
        %919 = vmatprep.subr.bf16.mxu0 0
        %920 = vmatpush1.bf16.xpose.msra.mxu0 0
        %921 = vmatprep.subr.bf16.mxu0 0
        %922 = vmatpush1.bf16.xpose.msra.mxu0 0
        %923 = vmatprep.subr.bf16.mxu0 0
        %924 = vmatpush1.bf16.xpose.msra.mxu0 0
        %925 = vmatprep.subr.bf16.mxu0 0
        %926 = vmatpush1.bf16.xpose.msra.mxu0 0
        %927 = vmatprep.subr.bf16.mxu0 0
        %928 = vmatpush1.bf16.xpose.msra.mxu0 0
        %929 = vmatprep.subr.bf16.mxu0 0
        %930 = vmatpush1.bf16.xpose.msra.mxu0 0
        %931 = vmatprep.subr.bf16.mxu0 0
        %932 = vmatpush1.bf16.xpose.msra.mxu0 0
        %933 = vmatprep.subr.bf16.mxu0 0
        %934 = vmatpush1.bf16.xpose.msra.mxu0 0
        %935 = vmatprep.subr.bf16.mxu0 0
        %936 = vmatpush1.bf16.xpose.msra.mxu0 0
        %937 = vmatprep.subr.bf16.mxu0 0
        %938 = vmatpush1.bf16.xpose.msra.mxu0 0
        %939 = vmatprep.subr.bf16.mxu0 0
        %940 = vmatpush1.bf16.xpose.msra.mxu0 0
        %941 = vmatprep.subr.bf16.mxu0 0
        %942 = vmatpush1.bf16.xpose.msra.mxu0 0
        %943 = vmatprep.mubr.bf16.mxu0 0
        %944 = vmatmul.mubr.bf16.gmra.mrb[0].mxu0 %v906
        %v945 = vpop.f32.mrb[0].mxu0
        %v946 = vadd.f32 0.0, %v945
        %v947 = vpop.f32.mrb[0].mxu0
        %v948 = vpop.f32.mrb[0].mxu0
        %v949 = vpop.f32.mrb[0].mxu0
        %950 = vdwg.mxu0
        %951 = vrot.lane.b32.xlu0 %v356, 112
        %v952 = vpop.permute.xlu0 %951
        %953 = vrot.lane.b32.xlu0 %v356, 80
        %v954 = vpop.permute.xlu0 %953
        %v956 = vsel %vm360, %v952, 0
        %v959 = vsel %vm360, %v954, 0
        %961 = vmatprep.subr.bf16.mxu0 0
        %962 = vmatpush1.bf16.xpose.msra.mxu0 %v959
        %963 = vmatprep.subr.bf16.mxu0 0
        %964 = vmatpush1.bf16.xpose.msra.mxu0 0
        %965 = vmatprep.subr.bf16.mxu0 0
        %966 = vmatpush1.bf16.xpose.msra.mxu0 0
        %967 = vmatprep.subr.bf16.mxu0 0
        %968 = vmatpush1.bf16.xpose.msra.mxu0 0
        %969 = vmatprep.subr.bf16.mxu0 0
        %970 = vmatpush1.bf16.xpose.msra.mxu0 0
        %971 = vmatprep.subr.bf16.mxu0 0
        %972 = vmatpush1.bf16.xpose.msra.mxu0 0
        %973 = vmatprep.subr.bf16.mxu0 0
        %974 = vmatpush1.bf16.xpose.msra.mxu0 0
        %975 = vmatprep.subr.bf16.mxu0 0
        %976 = vmatpush1.bf16.xpose.msra.mxu0 0
        %977 = vmatprep.subr.bf16.mxu0 0
        %978 = vmatpush1.bf16.xpose.msra.mxu0 0
        %979 = vmatprep.subr.bf16.mxu0 0
        %980 = vmatpush1.bf16.xpose.msra.mxu0 0
        %981 = vmatprep.subr.bf16.mxu0 0
        %982 = vmatpush1.bf16.xpose.msra.mxu0 0
        %983 = vmatprep.subr.bf16.mxu0 0
        %984 = vmatpush1.bf16.xpose.msra.mxu0 0
        %985 = vmatprep.subr.bf16.mxu0 0
        %986 = vmatpush1.bf16.xpose.msra.mxu0 0
        %987 = vmatprep.subr.bf16.mxu0 0
        %988 = vmatpush1.bf16.xpose.msra.mxu0 0
        %989 = vmatprep.subr.bf16.mxu0 0
        %990 = vmatpush1.bf16.xpose.msra.mxu0 0
        %991 = vmatprep.subr.bf16.mxu0 0
        %992 = vmatpush1.bf16.xpose.msra.mxu0 0
        %993 = vmatprep.mubr.bf16.mxu0 0
        %994 = vmatmul.mubr.bf16.gmra.mrb[0].mxu0 %v956
        %v995 = vpop.f32.mrb[0].mxu0
        %v996 = vadd.f32 0.0, %v995
        %v997 = vpop.f32.mrb[0].mxu0
        %v998 = vpop.f32.mrb[0].mxu0
        %v999 = vpop.f32.mrb[0].mxu0
        %1000 = vdwg.mxu0
        %v1001 = vsel %vm457, %v946, -1e+30
        %v1002 = vsel %vm457, %v996, -1e+30
        %v1003 = vsel %vm360, %v1001, -inf
        %1004 = vmax.xlane.f32.xlu0 %v1003
        %v1005 = vpop.xlane.xlu0 %1004
        %v1006 = vsel %vm360, %v1002, -inf
        %1007 = vmax.xlane.f32.xlu0 %v1006
        %v1008 = vpop.xlane.xlu0 %1007
        %v1009 = vsub.f32 %v1001, %v1005
        %v1010 = vsub.f32 %v1002, %v1008
        %v1011 = vmul.f32 %v1009, 1.442695
        %v1012 = vpow.pop %v1011
        %v1013 = vmul.f32 %v1010, 1.442695
        %v1014 = vpow.pop %v1013
        %v1015 = vsel %vm360, %v1012, 0.0
        %1016 = vadd.xlane.f32.xlu0 %v1015
        %v1017 = vpop.xlane.xlu0 %1016
        %v1018 = vsel %vm360, %v1014, 0.0
        %1019 = vadd.xlane.f32.xlu0 %v1018
        %v1020 = vpop.xlane.xlu0 %1019
        %v1021 = vrcp.pop %v1017
        %v1022 = vrcp.pop %v1020
        %v1023 = vmul.f32 %v1012, %v1021
        %v1024 = vmul.f32 %v1014, %v1022
        %v1025 = vpack.c.bf16 %v1023, %v1023
        %v1026 = vpack.c.bf16 %v1024, %v1024
        %1027 = vrot.lane.b32.xlu0 %v355, 48
        %v1028 = vpop.permute.xlu0 %1027
        %v1030 = vsel %vm360, %v1025, 0
        %v1033 = vsel %vm489, %v1028, 0
        %1035 = vmatprep.subr.bf16.mxu0 0
        %1036 = vmatpush1.bf16.msra.mxu0 %v1033
        %1037 = vmatprep.subr.bf16.mxu0 0
        %1038 = vmatpush1.bf16.msra.mxu0 0
        %1039 = vmatprep.subr.bf16.mxu0 0
        %1040 = vmatpush1.bf16.msra.mxu0 0
        %1041 = vmatprep.subr.bf16.mxu0 0
        %1042 = vmatpush1.bf16.msra.mxu0 0
        %1043 = vmatprep.subr.bf16.mxu0 0
        %1044 = vmatpush1.bf16.msra.mxu0 0
        %1045 = vmatprep.subr.bf16.mxu0 0
        %1046 = vmatpush1.bf16.msra.mxu0 0
        %1047 = vmatprep.subr.bf16.mxu0 0
        %1048 = vmatpush1.bf16.msra.mxu0 0
        %1049 = vmatprep.subr.bf16.mxu0 0
        %1050 = vmatpush1.bf16.msra.mxu0 0
        %1051 = vmatprep.subr.bf16.mxu0 0
        %1052 = vmatpush1.bf16.msra.mxu0 0
        %1053 = vmatprep.subr.bf16.mxu0 0
        %1054 = vmatpush1.bf16.msra.mxu0 0
        %1055 = vmatprep.subr.bf16.mxu0 0
        %1056 = vmatpush1.bf16.msra.mxu0 0
        %1057 = vmatprep.subr.bf16.mxu0 0
        %1058 = vmatpush1.bf16.msra.mxu0 0
        %1059 = vmatprep.subr.bf16.mxu0 0
        %1060 = vmatpush1.bf16.msra.mxu0 0
        %1061 = vmatprep.subr.bf16.mxu0 0
        %1062 = vmatpush1.bf16.msra.mxu0 0
        %1063 = vmatprep.subr.bf16.mxu0 0
        %1064 = vmatpush1.bf16.msra.mxu0 0
        %1065 = vmatprep.subr.bf16.mxu0 0
        %1066 = vmatpush1.bf16.msra.mxu0 0
        %1067 = vmatprep.mubr.bf16.mxu0 0
        %1068 = vmatmul.mubr.bf16.gmra.mrb[0].mxu0 %v1030
        %v1069 = vpop.f32.mrb[0].mxu0
        %v1070 = vadd.f32 0.0, %v1069
        %v1071 = vpop.f32.mrb[0].mxu0
        %v1072 = vpop.f32.mrb[0].mxu0
        %v1073 = vpop.f32.mrb[0].mxu0
        %1074 = vdwg.mxu0
        %1075 = vrot.lane.b32.xlu0 %v356, 48
        %v1076 = vpop.permute.xlu0 %1075
        %v1078 = vsel %vm360, %v1026, 0
        %v1081 = vsel %vm489, %v1076, 0
        %1083 = vmatprep.subr.bf16.mxu0 0
        %1084 = vmatpush1.bf16.msra.mxu0 %v1081
        %1085 = vmatprep.subr.bf16.mxu0 0
        %1086 = vmatpush1.bf16.msra.mxu0 0
        %1087 = vmatprep.subr.bf16.mxu0 0
        %1088 = vmatpush1.bf16.msra.mxu0 0
        %1089 = vmatprep.subr.bf16.mxu0 0
        %1090 = vmatpush1.bf16.msra.mxu0 0
        %1091 = vmatprep.subr.bf16.mxu0 0
        %1092 = vmatpush1.bf16.msra.mxu0 0
        %1093 = vmatprep.subr.bf16.mxu0 0
        %1094 = vmatpush1.bf16.msra.mxu0 0
        %1095 = vmatprep.subr.bf16.mxu0 0
        %1096 = vmatpush1.bf16.msra.mxu0 0
        %1097 = vmatprep.subr.bf16.mxu0 0
        %1098 = vmatpush1.bf16.msra.mxu0 0
        %1099 = vmatprep.subr.bf16.mxu0 0
        %1100 = vmatpush1.bf16.msra.mxu0 0
        %1101 = vmatprep.subr.bf16.mxu0 0
        %1102 = vmatpush1.bf16.msra.mxu0 0
        %1103 = vmatprep.subr.bf16.mxu0 0
        %1104 = vmatpush1.bf16.msra.mxu0 0
        %1105 = vmatprep.subr.bf16.mxu0 0
        %1106 = vmatpush1.bf16.msra.mxu0 0
        %1107 = vmatprep.subr.bf16.mxu0 0
        %1108 = vmatpush1.bf16.msra.mxu0 0
        %1109 = vmatprep.subr.bf16.mxu0 0
        %1110 = vmatpush1.bf16.msra.mxu0 0
        %1111 = vmatprep.subr.bf16.mxu0 0
        %1112 = vmatpush1.bf16.msra.mxu0 0
        %1113 = vmatprep.subr.bf16.mxu0 0
        %1114 = vmatpush1.bf16.msra.mxu0 0
        %1115 = vmatprep.mubr.bf16.mxu0 0
        %1116 = vmatmul.mubr.bf16.gmra.mrb[0].mxu0 %v1078
        %v1117 = vpop.f32.mrb[0].mxu0
        %v1118 = vadd.f32 0.0, %v1117
        %v1119 = vpop.f32.mrb[0].mxu0
        %v1120 = vpop.f32.mrb[0].mxu0
        %v1121 = vpop.f32.mrb[0].mxu0
        %1122 = vdwg.mxu0
        %v1123 = vpack.c.bf16 %v1118, %v1070
        %v1124 = vld [vmem:[#allocation7 + $0x8] sm:$0xf]
        %v1126 = vsel %vm360, %v1123, 0
        %v1129 = vsel %vm489, %v1124, 0
        %1131 = vmatprep.subr.bf16.mxu0 0
        %1132 = vmatpush1.bf16.msra.mxu0 %v1129
        %1133 = vmatprep.subr.bf16.mxu0 0
        %1134 = vmatpush1.bf16.msra.mxu0 0
        %1135 = vmatprep.subr.bf16.mxu0 0
        %1136 = vmatpush1.bf16.msra.mxu0 0
        %1137 = vmatprep.subr.bf16.mxu0 0
        %1138 = vmatpush1.bf16.msra.mxu0 0
        %1139 = vmatprep.subr.bf16.mxu0 0
        %1140 = vmatpush1.bf16.msra.mxu0 0
        %1141 = vmatprep.subr.bf16.mxu0 0
        %1142 = vmatpush1.bf16.msra.mxu0 0
        %1143 = vmatprep.subr.bf16.mxu0 0
        %1144 = vmatpush1.bf16.msra.mxu0 0
        %1145 = vmatprep.subr.bf16.mxu0 0
        %1146 = vmatpush1.bf16.msra.mxu0 0
        %1147 = vmatprep.subr.bf16.mxu0 0
        %1148 = vmatpush1.bf16.msra.mxu0 0
        %1149 = vmatprep.subr.bf16.mxu0 0
        %1150 = vmatpush1.bf16.msra.mxu0 0
        %1151 = vmatprep.subr.bf16.mxu0 0
        %1152 = vmatpush1.bf16.msra.mxu0 0
        %1153 = vmatprep.subr.bf16.mxu0 0
        %1154 = vmatpush1.bf16.msra.mxu0 0
        %1155 = vmatprep.subr.bf16.mxu0 0
        %1156 = vmatpush1.bf16.msra.mxu0 0
        %1157 = vmatprep.subr.bf16.mxu0 0
        %1158 = vmatpush1.bf16.msra.mxu0 0
        %1159 = vmatprep.subr.bf16.mxu0 0
        %1160 = vmatpush1.bf16.msra.mxu0 0
        %1161 = vmatprep.subr.bf16.mxu0 0
        %1162 = vmatpush1.bf16.msra.mxu0 0
        %1163 = vmatprep.mubr.bf16.mxu0 0
        %1164 = vmatmul.mubr.bf16.gmra.mrb[0].mxu0 %v1126
        %v1165 = vpop.f32.mrb[0].mxu0
        %v1166 = vadd.f32 0.0, %v1165
        %v1167 = vpop.f32.mrb[0].mxu0
        %v1168 = vpop.f32.mrb[0].mxu0
        %v1169 = vadd.f32 0.0, %v1168
        %v1170 = vpop.f32.mrb[0].mxu0
        %1171 = vdwg.mxu0
        %v1172 = vadd.f32 %v895, %v1166
        %v1173 = vadd.f32 %v898, %v1169
        %1174 = vrot.lane.b32.xlu0 %v355, 104
        %v1175 = vpop.permute.xlu0 %1174
        %1176 = vrot.lane.b32.xlu0 %v355, 72
        %v1177 = vpop.permute.xlu0 %1176
        %v1179 = vsel %vm360, %v1175, 0
        %v1182 = vsel %vm360, %v1177, 0
        %1184 = vmatprep.subr.bf16.mxu0 0
        %1185 = vmatpush1.bf16.xpose.msra.mxu0 %v1182
        %1186 = vmatprep.subr.bf16.mxu0 0
        %1187 = vmatpush1.bf16.xpose.msra.mxu0 0
        %1188 = vmatprep.subr.bf16.mxu0 0
        %1189 = vmatpush1.bf16.xpose.msra.mxu0 0
        %1190 = vmatprep.subr.bf16.mxu0 0
        %1191 = vmatpush1.bf16.xpose.msra.mxu0 0
        %1192 = vmatprep.subr.bf16.mxu0 0
        %1193 = vmatpush1.bf16.xpose.msra.mxu0 0
        %1194 = vmatprep.subr.bf16.mxu0 0
        %1195 = vmatpush1.bf16.xpose.msra.mxu0 0
        %1196 = vmatprep.subr.bf16.mxu0 0
        %1197 = vmatpush1.bf16.xpose.msra.mxu0 0
        %1198 = vmatprep.subr.bf16.mxu0 0
        %1199 = vmatpush1.bf16.xpose.msra.mxu0 0
        %1200 = vmatprep.subr.bf16.mxu0 0
        %1201 = vmatpush1.bf16.xpose.msra.mxu0 0
        %1202 = vmatprep.subr.bf16.mxu0 0
        %1203 = vmatpush1.bf16.xpose.msra.mxu0 0
        %1204 = vmatprep.subr.bf16.mxu0 0
        %1205 = vmatpush1.bf16.xpose.msra.mxu0 0
        %1206 = vmatprep.subr.bf16.mxu0 0
        %1207 = vmatpush1.bf16.xpose.msra.mxu0 0
        %1208 = vmatprep.subr.bf16.mxu0 0
        %1209 = vmatpush1.bf16.xpose.msra.mxu0 0
        %1210 = vmatprep.subr.bf16.mxu0 0
        %1211 = vmatpush1.bf16.xpose.msra.mxu0 0
        %1212 = vmatprep.subr.bf16.mxu0 0
        %1213 = vmatpush1.bf16.xpose.msra.mxu0 0
        %1214 = vmatprep.subr.bf16.mxu0 0
        %1215 = vmatpush1.bf16.xpose.msra.mxu0 0
        %1216 = vmatprep.mubr.bf16.mxu0 0
        %1217 = vmatmul.mubr.bf16.gmra.mrb[0].mxu0 %v1179
        %v1218 = vpop.f32.mrb[0].mxu0
        %v1219 = vadd.f32 0.0, %v1218
        %v1220 = vpop.f32.mrb[0].mxu0
        %v1221 = vpop.f32.mrb[0].mxu0
        %v1222 = vpop.f32.mrb[0].mxu0
        %1223 = vdwg.mxu0
        %1224 = vrot.lane.b32.xlu0 %v356, 104
        %v1225 = vpop.permute.xlu0 %1224
        %1226 = vrot.lane.b32.xlu0 %v356, 72
        %v1227 = vpop.permute.xlu0 %1226
        %v1229 = vsel %vm360, %v1225, 0
        %v1232 = vsel %vm360, %v1227, 0
        %1234 = vmatprep.subr.bf16.mxu0 0
        %1235 = vmatpush1.bf16.xpose.msra.mxu0 %v1232
        %1236 = vmatprep.subr.bf16.mxu0 0
        %1237 = vmatpush1.bf16.xpose.msra.mxu0 0
        %1238 = vmatprep.subr.bf16.mxu0 0
        %1239 = vmatpush1.bf16.xpose.msra.mxu0 0
        %1240 = vmatprep.subr.bf16.mxu0 0
        %1241 = vmatpush1.bf16.xpose.msra.mxu0 0
        %1242 = vmatprep.subr.bf16.mxu0 0
        %1243 = vmatpush1.bf16.xpose.msra.mxu0 0
        %1244 = vmatprep.subr.bf16.mxu0 0
        %1245 = vmatpush1.bf16.xpose.msra.mxu0 0
        %1246 = vmatprep.subr.bf16.mxu0 0
        %1247 = vmatpush1.bf16.xpose.msra.mxu0 0
        %1248 = vmatprep.subr.bf16.mxu0 0
        %1249 = vmatpush1.bf16.xpose.msra.mxu0 0
        %1250 = vmatprep.subr.bf16.mxu0 0
        %1251 = vmatpush1.bf16.xpose.msra.mxu0 0
        %1252 = vmatprep.subr.bf16.mxu0 0
        %1253 = vmatpush1.bf16.xpose.msra.mxu0 0
        %1254 = vmatprep.subr.bf16.mxu0 0
        %1255 = vmatpush1.bf16.xpose.msra.mxu0 0
        %1256 = vmatprep.subr.bf16.mxu0 0
        %1257 = vmatpush1.bf16.xpose.msra.mxu0 0
        %1258 = vmatprep.subr.bf16.mxu0 0
        %1259 = vmatpush1.bf16.xpose.msra.mxu0 0
        %1260 = vmatprep.subr.bf16.mxu0 0
        %1261 = vmatpush1.bf16.xpose.msra.mxu0 0
        %1262 = vmatprep.subr.bf16.mxu0 0
        %1263 = vmatpush1.bf16.xpose.msra.mxu0 0
        %1264 = vmatprep.subr.bf16.mxu0 0
        %1265 = vmatpush1.bf16.xpose.msra.mxu0 0
        %1266 = vmatprep.mubr.bf16.mxu0 0
        %1267 = vmatmul.mubr.bf16.gmra.mrb[0].mxu0 %v1229
        %v1268 = vpop.f32.mrb[0].mxu0
        %v1269 = vadd.f32 0.0, %v1268
        %v1270 = vpop.f32.mrb[0].mxu0
        %v1271 = vpop.f32.mrb[0].mxu0
        %v1272 = vpop.f32.mrb[0].mxu0
        %1273 = vdwg.mxu0
        %v1274 = vsel %vm457, %v1219, -1e+30
        %v1275 = vsel %vm457, %v1269, -1e+30
        %v1276 = vsel %vm360, %v1274, -inf
        %1277 = vmax.xlane.f32.xlu0 %v1276
        %v1278 = vpop.xlane.xlu0 %1277
        %v1279 = vsel %vm360, %v1275, -inf
        %1280 = vmax.xlane.f32.xlu0 %v1279
        %v1281 = vpop.xlane.xlu0 %1280
        %v1282 = vsub.f32 %v1274, %v1278
        %v1283 = vsub.f32 %v1275, %v1281
        %v1284 = vmul.f32 %v1282, 1.442695
        %v1285 = vpow.pop %v1284
        %v1286 = vmul.f32 %v1283, 1.442695
        %v1287 = vpow.pop %v1286
        %v1288 = vsel %vm360, %v1285, 0.0
        %1289 = vadd.xlane.f32.xlu0 %v1288
        %v1290 = vpop.xlane.xlu0 %1289
        %v1291 = vsel %vm360, %v1287, 0.0
        %1292 = vadd.xlane.f32.xlu0 %v1291
        %v1293 = vpop.xlane.xlu0 %1292
        %v1294 = vrcp.pop %v1290
        %v1295 = vrcp.pop %v1293
        %v1296 = vmul.f32 %v1285, %v1294
        %v1297 = vmul.f32 %v1287, %v1295
        %v1298 = vpack.c.bf16 %v1296, %v1296
        %v1299 = vpack.c.bf16 %v1297, %v1297
        %1300 = vrot.lane.b32.xlu0 %v355, 40
        %v1301 = vpop.permute.xlu0 %1300
        %v1303 = vsel %vm360, %v1298, 0
        %v1306 = vsel %vm489, %v1301, 0
        %1308 = vmatprep.subr.bf16.mxu0 0
        %1309 = vmatpush1.bf16.msra.mxu0 %v1306
        %1310 = vmatprep.subr.bf16.mxu0 0
        %1311 = vmatpush1.bf16.msra.mxu0 0
        %1312 = vmatprep.subr.bf16.mxu0 0
        %1313 = vmatpush1.bf16.msra.mxu0 0
        %1314 = vmatprep.subr.bf16.mxu0 0
        %1315 = vmatpush1.bf16.msra.mxu0 0
        %1316 = vmatprep.subr.bf16.mxu0 0
        %1317 = vmatpush1.bf16.msra.mxu0 0
        %1318 = vmatprep.subr.bf16.mxu0 0
        %1319 = vmatpush1.bf16.msra.mxu0 0
        %1320 = vmatprep.subr.bf16.mxu0 0
        %1321 = vmatpush1.bf16.msra.mxu0 0
        %1322 = vmatprep.subr.bf16.mxu0 0
        %1323 = vmatpush1.bf16.msra.mxu0 0
        %1324 = vmatprep.subr.bf16.mxu0 0
        %1325 = vmatpush1.bf16.msra.mxu0 0
        %1326 = vmatprep.subr.bf16.mxu0 0
        %1327 = vmatpush1.bf16.msra.mxu0 0
        %1328 = vmatprep.subr.bf16.mxu0 0
        %1329 = vmatpush1.bf16.msra.mxu0 0
        %1330 = vmatprep.subr.bf16.mxu0 0
        %1331 = vmatpush1.bf16.msra.mxu0 0
        %1332 = vmatprep.subr.bf16.mxu0 0
        %1333 = vmatpush1.bf16.msra.mxu0 0
        %1334 = vmatprep.subr.bf16.mxu0 0
        %1335 = vmatpush1.bf16.msra.mxu0 0
        %1336 = vmatprep.subr.bf16.mxu0 0
        %1337 = vmatpush1.bf16.msra.mxu0 0
        %1338 = vmatprep.subr.bf16.mxu0 0
        %1339 = vmatpush1.bf16.msra.mxu0 0
        %1340 = vmatprep.mubr.bf16.mxu0 0
        %1341 = vmatmul.mubr.bf16.gmra.mrb[0].mxu0 %v1303
        %v1342 = vpop.f32.mrb[0].mxu0
        %v1343 = vadd.f32 0.0, %v1342
        %v1344 = vpop.f32.mrb[0].mxu0
        %v1345 = vpop.f32.mrb[0].mxu0
        %v1346 = vpop.f32.mrb[0].mxu0
        %1347 = vdwg.mxu0
        %1348 = vrot.lane.b32.xlu0 %v356, 40
        %v1349 = vpop.permute.xlu0 %1348
        %v1351 = vsel %vm360, %v1299, 0
        %v1354 = vsel %vm489, %v1349, 0
        %1356 = vmatprep.subr.bf16.mxu0 0
        %1357 = vmatpush1.bf16.msra.mxu0 %v1354
        %1358 = vmatprep.subr.bf16.mxu0 0
        %1359 = vmatpush1.bf16.msra.mxu0 0
        %1360 = vmatprep.subr.bf16.mxu0 0
        %1361 = vmatpush1.bf16.msra.mxu0 0
        %1362 = vmatprep.subr.bf16.mxu0 0
        %1363 = vmatpush1.bf16.msra.mxu0 0
        %1364 = vmatprep.subr.bf16.mxu0 0
        %1365 = vmatpush1.bf16.msra.mxu0 0
        %1366 = vmatprep.subr.bf16.mxu0 0
        %1367 = vmatpush1.bf16.msra.mxu0 0
        %1368 = vmatprep.subr.bf16.mxu0 0
        %1369 = vmatpush1.bf16.msra.mxu0 0
        %1370 = vmatprep.subr.bf16.mxu0 0
        %1371 = vmatpush1.bf16.msra.mxu0 0
        %1372 = vmatprep.subr.bf16.mxu0 0
        %1373 = vmatpush1.bf16.msra.mxu0 0
        %1374 = vmatprep.subr.bf16.mxu0 0
        %1375 = vmatpush1.bf16.msra.mxu0 0
        %1376 = vmatprep.subr.bf16.mxu0 0
        %1377 = vmatpush1.bf16.msra.mxu0 0
        %1378 = vmatprep.subr.bf16.mxu0 0
        %1379 = vmatpush1.bf16.msra.mxu0 0
        %1380 = vmatprep.subr.bf16.mxu0 0
        %1381 = vmatpush1.bf16.msra.mxu0 0
        %1382 = vmatprep.subr.bf16.mxu0 0
        %1383 = vmatpush1.bf16.msra.mxu0 0
        %1384 = vmatprep.subr.bf16.mxu0 0
        %1385 = vmatpush1.bf16.msra.mxu0 0
        %1386 = vmatprep.subr.bf16.mxu0 0
        %1387 = vmatpush1.bf16.msra.mxu0 0
        %1388 = vmatprep.mubr.bf16.mxu0 0
        %1389 = vmatmul.mubr.bf16.gmra.mrb[0].mxu0 %v1351
        %v1390 = vpop.f32.mrb[0].mxu0
        %v1391 = vadd.f32 0.0, %v1390
        %v1392 = vpop.f32.mrb[0].mxu0
        %v1393 = vpop.f32.mrb[0].mxu0
        %v1394 = vpop.f32.mrb[0].mxu0
        %1395 = vdwg.mxu0
        %v1396 = vpack.c.bf16 %v1391, %v1343
        %v1397 = vld [vmem:[#allocation7 + $0xc] sm:$0xf]
        %v1399 = vsel %vm360, %v1396, 0
        %v1402 = vsel %vm489, %v1397, 0
        %1404 = vmatprep.subr.bf16.mxu0 0
        %1405 = vmatpush1.bf16.msra.mxu0 %v1402
        %1406 = vmatprep.subr.bf16.mxu0 0
        %1407 = vmatpush1.bf16.msra.mxu0 0
        %1408 = vmatprep.subr.bf16.mxu0 0
        %1409 = vmatpush1.bf16.msra.mxu0 0
        %1410 = vmatprep.subr.bf16.mxu0 0
        %1411 = vmatpush1.bf16.msra.mxu0 0
        %1412 = vmatprep.subr.bf16.mxu0 0
        %1413 = vmatpush1.bf16.msra.mxu0 0
        %1414 = vmatprep.subr.bf16.mxu0 0
        %1415 = vmatpush1.bf16.msra.mxu0 0
        %1416 = vmatprep.subr.bf16.mxu0 0
        %1417 = vmatpush1.bf16.msra.mxu0 0
        %1418 = vmatprep.subr.bf16.mxu0 0
        %1419 = vmatpush1.bf16.msra.mxu0 0
        %1420 = vmatprep.subr.bf16.mxu0 0
        %1421 = vmatpush1.bf16.msra.mxu0 0
        %1422 = vmatprep.subr.bf16.mxu0 0
        %1423 = vmatpush1.bf16.msra.mxu0 0
        %1424 = vmatprep.subr.bf16.mxu0 0
        %1425 = vmatpush1.bf16.msra.mxu0 0
        %1426 = vmatprep.subr.bf16.mxu0 0
        %1427 = vmatpush1.bf16.msra.mxu0 0
        %1428 = vmatprep.subr.bf16.mxu0 0
        %1429 = vmatpush1.bf16.msra.mxu0 0
        %1430 = vmatprep.subr.bf16.mxu0 0
        %1431 = vmatpush1.bf16.msra.mxu0 0
        %1432 = vmatprep.subr.bf16.mxu0 0
        %1433 = vmatpush1.bf16.msra.mxu0 0
        %1434 = vmatprep.subr.bf16.mxu0 0
        %1435 = vmatpush1.bf16.msra.mxu0 0
        %1436 = vmatprep.mubr.bf16.mxu0 0
        %1437 = vmatmul.mubr.bf16.gmra.mrb[0].mxu0 %v1399
        %v1438 = vpop.f32.mrb[0].mxu0
        %v1439 = vadd.f32 0.0, %v1438
        %v1440 = vpop.f32.mrb[0].mxu0
        %v1441 = vpop.f32.mrb[0].mxu0
        %v1442 = vadd.f32 0.0, %v1441
        %v1443 = vpop.f32.mrb[0].mxu0
        %1444 = vdwg.mxu0
        %v1445 = vadd.f32 %v1172, %v1439
        %v1446 = vadd.f32 %v1173, %v1442
        %v1447 = vld [vmem:[%s4] sm:$0x1]
        %v1449 = vlaneseq
        %v1450 = vshrl.u32 %v1449, 7
        %v1451 = vsub.s32 0, %v1450
        %v1452 = vrot.slane %v1447, %v1451
        %v1454 = vadd.f32 %v1445, %v1452
        %v1455 = vadd.f32 %v1446, %v1452
        %1456 = vst.msk [vmem:[%s271] sm:$0xff] %vm305, %v1454
        %1457 = vst.msk [vmem:[%s271 + $0x8] sm:$0xff] %vm305, %v1455
        %s1458 = sand.u32 %s141, 1
        %s1459 = scalar_lea.sflag [#allocation4], %s1458
        %s1460 = sand.u32 %s141, 1
        %s1461 = smul.addr %s1460, 16
        %s1462 = scalar_lea.vmem [#allocation8], %s1461
        // Predicated region
        $region53: #{tpu_custom_call.1} parent=39 // pred_check
          %p1463 = pneg %p151
        $region54: #{tpu_custom_call.1} parent=39 // pred_check_branch
          %1465 = sbr.rel (%p1463) target = $region56
        $region55: #{tpu_custom_call.1} parent=39 // pred_region
          %s1466 = smul.u32 2, %s23
          %s1468 = ssub.s32 256, 256
          %1469 = vsyncadd %s1459, %s1468
          %s1470 = smul.addr %s1466, 128
          %s1471 = scalar_lea.hbm %s5, %s1470
          %s1472 = sshll.u32 %s1462, 4
          %s1473 = int_to_ptr.vmem [resolvable:$true] %s1472
          %1478 = dma.vmem_to_hbm [thread:$0]  %s1473, 256, %s1471, %s1459, 128, 128, 8
        $region56: #{tpu_custom_call.1} parent=39 // pred_fallthru
          _
      $region40: #{tpu_custom_call.1} parent=5 // pred_fallthru
        _
      %p1479 = scmp.le.s32.totalorder 2, %s18
      // Predicated region
      $region57: #{tpu_custom_call.1} parent=5 // pred_check
        %p1480 = pneg %p1479
      $region58: #{tpu_custom_call.1} parent=5 // pred_check_branch
        %1482 = sbr.rel (%p1480) target = $region60
      $region59: #{tpu_custom_call.1} parent=5 // pred_region
        %s1483 = ssub.s32 %s18, 2
        // Predicated region
        $region61: #{tpu_custom_call.1} parent=59 // pred_check
          %p1484 = pneg %p157
        $region62: #{tpu_custom_call.1} parent=59 // pred_check_branch
          %1486 = sbr.rel (%p1484) target = $region64
        $region63: #{tpu_custom_call.1} parent=59 // pred_region
          %s1487 = sand.u32 %s142, 1
          %s1488 = scalar_lea.sflag [#allocation4], %s1487
          %s1489 = sand.u32 %s142, 1
          %s1490 = smul.addr %s1489, 16
          %s1491 = scalar_lea.vmem [#allocation8], %s1490
          %1492 = dma.done %s1488, 256
        $region64: #{tpu_custom_call.1} parent=59 // pred_fallthru
          _
      $region60: #{tpu_custom_call.1} parent=5 // pred_fallthru
        _
    $region6: #{tpu_custom_call.1} parent=1 // loop_footer
      %s22 = sadd.s32 1, %s18
    $region7: #{tpu_custom_call.1} parent=1 // loop_footer_branch
      %17 = sbr.rel target = $region3
    $region8: #{tpu_custom_call.1} parent=1 // loop_exit
      _
    %1493 = vsyncpa [#allocation3], 1
    %s1494 = scalar_lea.sflag [#allocation3], 1
    %1495 = vsyncpa %s1494, 1
    %1496 = vsyncpa [#allocation6], 1
    %1497 = vsyncpa [#allocation4], 1
    %s1498 = scalar_lea.sflag [#allocation4], 1
    %1499 = vsyncpa %s1498, 1

</llo_original>
